<compile_context>
chip_gen: v7x
topology: tpu7x:2x2x1
jax: 0.10.0
libtpu: 0.0.40
codegen_flags: <defaults>
</compile_context>

<pallas_src>
import functools
import math

import jax
import jax.numpy as jnp
from jax.experimental import pallas as pl
from jax.experimental.pallas import tpu as pltpu


# ---------------------------- sizing helpers -------------------------------- #

TM_TARGET = 256      # seq tile for the projections
TN_TARGET = 256      # output-column tile for the O projection
TQ_TARGET = 256      # query tile for attention
TKV_TARGET = 256     # key/value tile for attention


def _vmem_limit_bytes():
    """Scoped-VMEM limit: ~3/4 of physical VMEM (96 MiB v5e/v6e, 48 MiB v7x)."""
    try:
        cap = getattr(pltpu.get_tpu_info(), "vmem_capacity_bytes", None)
        if cap:
            return int(cap) * 3 // 4
    except Exception:
        pass
    return 64 * 1024 * 1024


def _pick_tile(dim, target, align=128):
    """Largest 128-aligned divisor of `dim` <= target (falls back to any divisor)."""
    if dim <= target:
        return dim
    t = (target // align) * align
    while t >= align:
        if dim % t == 0:
            return t
        t -= align
    for t in range(min(target, dim), 0, -1):
        if dim % t == 0:
            return t
    return dim


def _pick_head_group(nh, hd, target_cols=256):
    """Heads per projection column step.  g*hd must be a 128-multiple (lane-dense
    weight / output tiles) unless g == nh (block == full width, always legal)."""
    g = max(1, min(nh, target_cols // max(hd, 1)))
    while g > 1 and (nh % g != 0 or (g * hd) % 128 != 0):
        g -= 1
    if (g * hd) % 128 != 0 and g != nh:
        g = nh
    return g


# ------------------------------- kernels ------------------------------------ #

def rmsnorm_qkv_rope_kernel(x_ref, g_ref, cos_ref, sin_ref,
                            wq_ref, wk_ref, wv_ref,
                            q_ref, k_ref, v_ref, xn_ref,
                            *, eps, gh, hd, rope_n_elem, scale):
    # x_ref: (1, tm, D)   g_ref: (1, D)   cos/sin: (tm, rope_n_elem)
    # wq/wk/wv_ref: (D, gh*hd)   q/k/v_ref: (1, gh, tm, hd)
    # xn_ref: (tm, D) f32 scratch -- normalized activation, computed once per
    # (b, seq-tile) at the first head-group step and reused afterwards.
    @pl.when(pl.program_id(2) == 0)
    def _():
        x = x_ref[0].astype(jnp.float32)
        ms = jnp.mean(x * x, axis=-1, keepdims=True)
        xn_ref[...] = (x * jax.lax.rsqrt(ms + eps)) * g_ref[0].astype(jnp.float32)

    y = xn_ref[...].astype(wq_ref.dtype)          # bf16 operands if bf16 weights
    cos = cos_ref[...].astype(jnp.float32)
    sin = sin_ref[...].astype(jnp.float32)

    qf = jnp.dot(y, wq_ref[...], preferred_element_type=jnp.float32)   # (tm, gh*hd)
    kf = jnp.dot(y, wk_ref[...], preferred_element_type=jnp.float32)
    vf = jnp.dot(y, wv_ref[...], preferred_element_type=jnp.float32)

    def rope(t):                                  # t: (tm, hd) f32
        if rope_n_elem == 0:
            return t
        r = t[:, :rope_n_elem]
        half = rope_n_elem // 2
        rot = jnp.concatenate((-r[:, half:], r[:, :half]), axis=-1)
        roped = r * cos + rot * sin
        if rope_n_elem == hd:
            return roped
        return jnp.concatenate((roped, t[:, rope_n_elem:]), axis=-1)

    # Per-head lane slices + per-head block stores: head split without any
    # transpose and without a separate HBM pass.
    for g in range(gh):
        lo, hi = g * hd, (g + 1) * hd
        q_ref[0, g] = (rope(qf[:, lo:hi]) * scale).astype(q_ref.dtype)
        k_ref[0, g] = rope(kf[:, lo:hi]).astype(k_ref.dtype)
        v_ref[0, g] = vf[:, lo:hi].astype(v_ref.dtype)


def flash_attn_kernel(q_ref, k_ref, v_ref, o_ref, m_sc, l_sc, acc_sc,
                      *, window, tq, tkv):
    # q_ref: (1, NH, tq, hd)   k/v_ref: (1, NH, tkv, hd)   o_ref: (1, NH, tq, hd)
    # scratch: m_sc/l_sc (NH, tq, 1) f32, acc_sc (NH, tq, hd) f32
    # q is pre-scaled by 1/sqrt(hd) and RoPE'd in the projection kernel.
    qi = pl.program_id(1)
    ik = pl.program_id(2)                         # banded inner KV index

    q_start = qi * tq
    lo_blk = jnp.maximum(q_start - window, 0) // tkv
    hi_blk = (q_start + tq - 1) // tkv
    kb = jnp.minimum(lo_blk + ik, hi_blk)         # matches the kv index_map
    in_band = (lo_blk + ik) <= hi_blk

    @pl.when(ik == 0)
    def _init():
        m_sc[...] = jnp.full_like(m_sc, -jnp.inf)
        l_sc[...] = jnp.zeros_like(l_sc)
        acc_sc[...] = jnp.zeros_like(acc_sc)

    def update(masked):
        q = q_ref[0]                              # (NH, tq, hd)
        k = k_ref[0]                              # (NH, tkv, hd)
        s = jnp.einsum("hqd,hkd->hqk", q, k,
                       preferred_element_type=jnp.float32)      # (NH, tq, tkv)
        m_prev = m_sc[...]
        if masked:
            row = q_start + jax.lax.broadcasted_iota(jnp.int32, (tq, tkv), 0)
            col = kb * tkv + jax.lax.broadcasted_iota(jnp.int32, (tq, tkv), 1)
            # causal + sliding window (flash_attn window_size=(window, 0))
            mask = (col <= row) & (col >= row - window)
            # Finite fill keeps fully-masked rows NaN-free; the where on p is
            # load-bearing for band-edge tiles (keeps masked entries at 0).
            s = jnp.where(mask, s, -1e30)
            m_new = jnp.maximum(m_prev, jnp.max(s, axis=-1, keepdims=True))
            p = jnp.where(mask, jnp.exp(s - m_new), 0.0)
        else:
            m_new = jnp.maximum(m_prev, jnp.max(s, axis=-1, keepdims=True))
            p = jnp.exp(s - m_new)
        alpha = jnp.exp(m_prev - m_new)
        l_sc[...] = alpha * l_sc[...] + jnp.sum(p, axis=-1, keepdims=True)
        acc_sc[...] = alpha * acc_sc[...] + jnp.einsum(
            "hqk,hkd->hqd", p.astype(v_ref.dtype), v_ref[0],
            preferred_element_type=jnp.float32)
        m_sc[...] = m_new

    # KV tile strictly inside the causal+window band -> no mask work at all.
    interior = (kb * tkv >= q_start + tq - 1 - window) & \
               ((kb + 1) * tkv <= q_start + 1)

    @pl.when(in_band & interior)
    def _fast():
        update(masked=False)

    @pl.when(in_band & jnp.logical_not(interior))
    def _edge():
        update(masked=True)

    @pl.when(ik == pl.num_programs(2) - 1)
    def _finalize():
        inv = pl.reciprocal(l_sc[...])            # exact: stays within 1e-4
        o_ref[0] = (acc_sc[...] * inv).astype(o_ref.dtype)


def oproj_kernel(a_ref, w_ref, o_ref, *, nh):
    # Fused head-merge + output projection, all heads reduced inside one step.
    # a_ref: (1, NH, tm, hd)   w_ref: (NH, hd, tn)   o_ref: (1, tm, tn)
    out = jnp.zeros(o_ref.shape[1:], jnp.float32)
    for h in range(nh):
        out = out + jnp.dot(a_ref[0, h].astype(w_ref.dtype), w_ref[h],
                            preferred_element_type=jnp.float32)
    o_ref[0] = out.astype(o_ref.dtype)


# ------------------------------- wrapper ------------------------------------ #

def attention_forward(x, cos, sin, gamma, qkv_w, o_w, *,
                      num_heads, rope_n_elem, sliding_window, eps=1e-5,
                      interm_dtype=None, seq_tile=None, q_tile=None, kv_tile=None):
    """x: (B, S, D). qkv_w: (D, 3D), o_w: (D, D) (pre-transposed: y = x @ W).
    cos/sin: (S, rope_n_elem).  interm_dtype=bf16 halves inter-stage HBM traffic
    at scale (accumulation stays f32)."""
    B, S, D = x.shape
    NH = num_heads
    assert D % NH == 0
    hd = D // NH
    assert rope_n_elem > 0 and rope_n_elem % 2 == 0 and rope_n_elem <= hd

    interm = jnp.dtype(interm_dtype or x.dtype)
    vmem_limit = _vmem_limit_bytes()
    budget = int(vmem_limit * 0.9)
    it = interm.itemsize
    wit = jnp.dtype(qkv_w.dtype).itemsize
    xit = jnp.dtype(x.dtype).itemsize
    scale = 1.0 / math.sqrt(hd)

    # ---- 1) fused RMSNorm + QKV projection + head-split + RoPE -------------
    gh = _pick_head_group(NH, hd)
    tnw = gh * hd
    tm = seq_tile or _pick_tile(S, TM_TARGET)
    while (2 * tm * D * xit + 2 * 3 * D * tnw * wit + 2 * 3 * tm * tnw * it
           + tm * D * 4) > budget and tm > 8 and tm % 2 == 0:
        tm //= 2
    assert S % tm == 0

    wq, wk, wv = jnp.split(qkv_w, 3, axis=1)       # (D, D) each, head-major cols
    qkv_shape = jax.ShapeDtypeStruct((B, NH, S, hd), interm)

    q, k, v = pl.pallas_call(
        functools.partial(rmsnorm_qkv_rope_kernel, eps=eps, gh=gh, hd=hd,
                          rope_n_elem=rope_n_elem, scale=scale),
        out_shape=(qkv_shape, qkv_shape, qkv_shape),
        grid=(B, S // tm, NH // gh),
        in_specs=[
            pl.BlockSpec((1, tm, D), lambda b, si, hg: (b, si, 0)),
            pl.BlockSpec((1, D), lambda b, si, hg: (0, 0)),
            pl.BlockSpec((tm, rope_n_elem), lambda b, si, hg: (si, 0)),
            pl.BlockSpec((tm, rope_n_elem), lambda b, si, hg: (si, 0)),
            pl.BlockSpec((D, tnw), lambda b, si, hg: (0, hg)),
            pl.BlockSpec((D, tnw), lambda b, si, hg: (0, hg)),
            pl.BlockSpec((D, tnw), lambda b, si, hg: (0, hg)),
        ],
        out_specs=(
            pl.BlockSpec((1, gh, tm, hd), lambda b, si, hg: (b, hg, si, 0)),
            pl.BlockSpec((1, gh, tm, hd), lambda b, si, hg: (b, hg, si, 0)),
            pl.BlockSpec((1, gh, tm, hd), lambda b, si, hg: (b, hg, si, 0)),
        ),
        scratch_shapes=[pltpu.VMEM((tm, D), jnp.float32)],
        compiler_params=pltpu.CompilerParams(
            dimension_semantics=("parallel", "parallel", "arbitrary"),
            vmem_limit_bytes=vmem_limit),
    )(x, gamma[None, :], cos, sin, wq, wk, wv)

    # ---- 2) banded flash attention (causal + sliding window) ----------------
    tq = q_tile or _pick_tile(S, TQ_TARGET)
    tkv = kv_tile or _pick_tile(S, TKV_TARGET)

    def _attn_bytes(tq_, tkv_):
        return (2 * (2 * tq_ * D + 2 * tkv_ * D) * it      # q,out + k,v (dbl buf)
                + tq_ * D * 4 + 2 * NH * tq_ * 4           # acc + m,l scratch
                + 3 * NH * tq_ * tkv_ * 4)                  # s/p f32 temporaries
    while _attn_bytes(tq, tkv) > budget and tkv > 128 and tkv % 2 == 0:
        tkv //= 2
    while _attn_bytes(tq, tkv) > budget and tq > 128 and tq % 2 == 0:
        tq //= 2
    assert S % tq == 0 and S % tkv == 0

    # KV grid spans only the sliding-window band of each Q tile (plus at most
    # one alignment-slack step whose DMA is reused and compute skipped).
    nkv_total = S // tkv
    nkv_band = min(nkv_total, pl.cdiv(tq + sliding_window, tkv) + 1)

    def q_index(b, qi, ik):
        return (b, 0, qi, 0)

    def kv_index(b, qi, ik):
        lo = jnp.maximum(qi * tq - sliding_window, 0) // tkv
        hi = (qi * tq + tq - 1) // tkv
        return (b, 0, jnp.minimum(lo + ik, hi), 0)

    attn = pl.pallas_call(
        functools.partial(flash_attn_kernel, window=sliding_window, tq=tq, tkv=tkv),
        out_shape=jax.ShapeDtypeStruct((B, NH, S, hd), interm),
        grid=(B, S // tq, nkv_band),
        in_specs=[
            pl.BlockSpec((1, NH, tq, hd), q_index),
            pl.BlockSpec((1, NH, tkv, hd), kv_index),
            pl.BlockSpec((1, NH, tkv, hd), kv_index),
        ],
        out_specs=pl.BlockSpec((1, NH, tq, hd), q_index),
        scratch_shapes=[
            pltpu.VMEM((NH, tq, 1), jnp.float32),      # running max m
            pltpu.VMEM((NH, tq, 1), jnp.float32),      # running denom l
            pltpu.VMEM((NH, tq, hd), jnp.float32),     # output accumulator
        ],
        compiler_params=pltpu.CompilerParams(
            dimension_semantics=("parallel", "parallel", "arbitrary"),
            vmem_limit_bytes=vmem_limit),
    )(q, k, v)

    # ---- 3) fused head-merge + output projection -----------------------------
    tmo = seq_tile or _pick_tile(S, TM_TARGET)
    tno = _pick_tile(D, TN_TARGET)
    while (2 * (tmo * D * it + D * tno * wit + tmo * tno * xit)) > budget \
            and tmo > 8 and tmo % 2 == 0:
        tmo //= 2
    assert S % tmo == 0 and D % tno == 0

    o_w3 = o_w.reshape(NH, hd, D)                  # free reshape, head-major rows

    y = pl.pallas_call(
        functools.partial(oproj_kernel, nh=NH),
        out_shape=jax.ShapeDtypeStruct((B, S, D), x.dtype),
        grid=(B, S // tmo, D // tno),
        in_specs=[
            pl.BlockSpec((1, NH, tmo, hd), lambda b, si, ni: (b, 0, si, 0)),
            pl.BlockSpec((NH, hd, tno), lambda b, si, ni: (0, 0, ni)),
        ],
        out_specs=pl.BlockSpec((1, tmo, tno), lambda b, si, ni: (b, si, ni)),
        compiler_params=pltpu.CompilerParams(
            dimension_semantics=("parallel", "parallel", "parallel"),
            vmem_limit_bytes=vmem_limit),
    )(attn, o_w3)

    return y


# --------------------------- pure-JAX reference ----------------------------- #

def attention_reference(x, cos, sin, gamma, qkv_w, o_w, *,
                        num_heads, rope_n_elem, sliding_window, eps=1e-5):
    B, S, D = x.shape
    hd = D // num_heads
    ms = jnp.mean(x * x, axis=-1, keepdims=True)
    xn = gamma * (x * jax.lax.rsqrt(ms + eps))
    qkv = xn @ qkv_w
    q, k, v = jnp.split(qkv, 3, axis=-1)
    q, k, v = [t.reshape(B, S, num_heads, hd).transpose(0, 2, 1, 3)
               for t in (q, k, v)]

    def rope(t):
        tr = t[..., :rope_n_elem]
        half = rope_n_elem // 2
        rot = jnp.concatenate((-tr[..., half:], tr[..., :half]), axis=-1)
        return jnp.concatenate((tr * cos + rot * sin, t[..., rope_n_elem:]), axis=-1)

    q, k = rope(q), rope(k)
    s = jnp.einsum("bhqd,bhkd->bhqk", q, k) / math.sqrt(hd)
    row = jnp.arange(S)[:, None]
    col = jnp.arange(S)[None, :]
    mask = (col <= row) & (col >= row - sliding_window)
    s = jnp.where(mask, s, -jnp.inf)
    p = jax.nn.softmax(s, axis=-1)
    o = jnp.einsum("bhqk,bhkd->bhqd", p, v)
    o = o.transpose(0, 2, 1, 3).reshape(B, S, D)
    return o @ o_w


# --------------------------------- main -------------------------------------- #

def _run_case(key, *, B, S, hidden_dim, num_heads, rope_n_elem, sliding_window, **kw):
    kx, kq, ko = jax.random.split(key, 3)
    x = jax.random.normal(kx, (B, S, hidden_dim), dtype=jnp.float32)
    qkv_w = jax.random.normal(kq, (hidden_dim, 3 * hidden_dim), jnp.float32) * 0.05
    o_w = jax.random.normal(ko, (hidden_dim, hidden_dim), jnp.float32) * 0.05
    gamma = jnp.ones((hidden_dim,), jnp.float32)

    half = rope_n_elem // 2
    inv_freq = 1.0 / (10000.0 ** (jnp.arange(half, dtype=jnp.float32) / half))
    ang = jnp.arange(S, dtype=jnp.float32)[:, None] * inv_freq[None, :]
    cos = jnp.concatenate([jnp.cos(ang), jnp.cos(ang)], axis=-1)
    sin = jnp.concatenate([jnp.sin(ang), jnp.sin(ang)], axis=-1)

    out = attention_forward(x, cos, sin, gamma, qkv_w, o_w,
                            num_heads=num_heads, rope_n_elem=rope_n_elem,
                            sliding_window=sliding_window, **kw)
    out = jax.block_until_ready(out)
    ref = attention_reference(x, cos, sin, gamma, qkv_w, o_w,
                              num_heads=num_heads, rope_n_elem=rope_n_elem,
                              sliding_window=sliding_window)
    assert out.shape == (B, S, hidden_dim)
    assert jnp.allclose(out, ref, atol=1e-4, rtol=1e-4), \
        float(jnp.max(jnp.abs(out - ref)))


if __name__ == "__main__":
    key = jax.random.PRNGKey(0)
    k1, k2 = jax.random.split(key)

    # Small shape implied by the module (B=2, S=8, hidden=32, 4 heads).
    _run_case(k1, B=2, S=8, hidden_dim=32, num_heads=4,
              rope_n_elem=4, sliding_window=4)

    # Multi-tile case (forced small tiles) exercising the banded KV grid,
    # the unmasked interior fast path, the masked edge path and the
    # out-of-band skipped/clamped steps.
    _run_case(k2, B=1, S=32, hidden_dim=32, num_heads=4,
              rope_n_elem=4, sliding_window=16,
              seq_tile=8, q_tile=8, kv_tile=8)

    print("KERNEL_OK")
</pallas_src>

<mosaic_0001>
module attributes {stable_mosaic.version = 11 : i64} {
  func.func @rmsnorm_qkv_rope_kernel(%arg0: i32, %arg1: i32, %arg2: i32, %arg3: memref<1x8x32xf32, #tpu.memory_space<vmem>>, %arg4: memref<1x32xf32, #tpu.memory_space<vmem>>, %arg5: memref<8x4xf32, #tpu.memory_space<vmem>>, %arg6: memref<8x4xf32, #tpu.memory_space<vmem>>, %arg7: memref<32x32xf32, #tpu.memory_space<vmem>>, %arg8: memref<32x32xf32, #tpu.memory_space<vmem>>, %arg9: memref<32x32xf32, #tpu.memory_space<vmem>>, %arg10: memref<1x4x8x8xf32, #tpu.memory_space<vmem>>, %arg11: memref<1x4x8x8xf32, #tpu.memory_space<vmem>>, %arg12: memref<1x4x8x8xf32, #tpu.memory_space<vmem>>, %arg13: memref<8x32xf32, #tpu.memory_space<vmem>>) attributes {dimension_semantics = [#tpu.dimension_semantics<parallel>, #tpu.dimension_semantics<parallel>, #tpu.dimension_semantics<arbitrary>], iteration_bounds = array<i64: 2, 1, 1>, scalar_prefetch = 0 : i64, scratch_operands = 1 : i64, tpu.core_type = #tpu.core_type<tc>, window_params = [{transform_indices = @transform_0, window_bounds = array<i64: 1, 8, 32>}, {pipeline_mode = #tpu.pipeline_mode<synchronous>, transform_indices = @transform_1, window_bounds = array<i64: 1, 32>}, {transform_indices = @transform_2, window_bounds = array<i64: 8, 4>}, {transform_indices = @transform_3, window_bounds = array<i64: 8, 4>}, {transform_indices = @transform_4, window_bounds = array<i64: 32, 32>}, {transform_indices = @transform_5, window_bounds = array<i64: 32, 32>}, {transform_indices = @transform_6, window_bounds = array<i64: 32, 32>}, {transform_indices = @transform_7, window_bounds = array<i64: 1, 4, 8, 8>}, {transform_indices = @transform_8, window_bounds = array<i64: 1, 4, 8, 8>}, {transform_indices = @transform_9, window_bounds = array<i64: 1, 4, 8, 8>}]} {
    %c0_i32 = arith.constant 0 : i32
    %0 = arith.cmpi eq, %arg2, %c0_i32 : i32
    %1 = arith.extui %0 : i1 to i32
    %c0_i32_0 = arith.constant 0 : i32
    %2 = arith.cmpi ne, %1, %c0_i32_0 : i32
    scf.if %2 {
      %c0_71 = arith.constant 0 : index
      %c0_72 = arith.constant 0 : index
      %c0_73 = arith.constant 0 : index
      %156 = vector.load %arg3[%c0_71, %c0_72, %c0_73] : memref<1x8x32xf32, #tpu.memory_space<vmem>>, vector<1x8x32xf32>
      %157 = vector.shape_cast %156 : vector<1x8x32xf32> to vector<8x32xf32>
      %158 = arith.mulf %157, %157 : vector<8x32xf32>
      %cst_74 = arith.constant dense<0.000000e+00> : vector<8xf32>
      %159 = vector.multi_reduction <add>, %158, %cst_74 [1] : vector<8x32xf32> to vector<8xf32>
      %160 = vector.shape_cast %159 : vector<8xf32> to vector<8x1xf32>
      %cst_75 = arith.constant 3.200000e+01 : f32
      %161 = vector.broadcast %cst_75 : f32 to vector<8x1xf32>
      %162 = arith.divf %160, %161 : vector<8x1xf32>
      %cst_76 = arith.constant 9.99999974E-6 : f32
      %163 = vector.broadcast %cst_76 : f32 to vector<8x1xf32>
      %164 = arith.addf %162, %163 : vector<8x1xf32>
      %165 = math.rsqrt %164 : vector<8x1xf32>
      %166 = vector.broadcast %165 : vector<8x1xf32> to vector<8x32xf32>
      %167 = arith.mulf %157, %166 : vector<8x32xf32>
      %c0_77 = arith.constant 0 : index
      %c0_78 = arith.constant 0 : index
      %168 = vector.load %arg4[%c0_77, %c0_78] : memref<1x32xf32, #tpu.memory_space<vmem>>, vector<1x32xf32>
      %169 = vector.shape_cast %168 : vector<1x32xf32> to vector<32xf32>
      %170 = vector.shape_cast %169 : vector<32xf32> to vector<1x32xf32>
      %171 = vector.broadcast %170 : vector<1x32xf32> to vector<8x32xf32>
      %172 = arith.mulf %167, %171 : vector<8x32xf32>
      %c0_79 = arith.constant 0 : index
      %c0_80 = arith.constant 0 : index
      %173 = vector.load %arg13[%c0_79, %c0_80] : memref<8x32xf32, #tpu.memory_space<vmem>>, vector<8x32xf32>
      tpu.vector_store %arg13[%c0_79, %c0_80], %172 {strides = array<i32>} : memref<8x32xf32, #tpu.memory_space<vmem>>, vector<8x32xf32>,
    } else {
    }
    %c0 = arith.constant 0 : index
    %c0_1 = arith.constant 0 : index
    %3 = vector.load %arg13[%c0, %c0_1] : memref<8x32xf32, #tpu.memory_space<vmem>>, vector<8x32xf32>
    %c0_2 = arith.constant 0 : index
    %c0_3 = arith.constant 0 : index
    %4 = vector.load %arg5[%c0_2, %c0_3] : memref<8x4xf32, #tpu.memory_space<vmem>>, vector<8x4xf32>
    %c0_4 = arith.constant 0 : index
    %c0_5 = arith.constant 0 : index
    %5 = vector.load %arg6[%c0_4, %c0_5] : memref<8x4xf32, #tpu.memory_space<vmem>>, vector<8x4xf32>
    %c0_6 = arith.constant 0 : index
    %c0_7 = arith.constant 0 : index
    %6 = vector.load %arg7[%c0_6, %c0_7] : memref<32x32xf32, #tpu.memory_space<vmem>>, vector<32x32xf32>
    %cst = arith.constant dense<0.000000e+00> : vector<8x32xf32>
    %7 = tpu.matmul %3, %6, %cst {dimension_numbers = #tpu.dot_dimension_numbers<[1], [0], [0], [1], [0, 0, 1, 1], [], []>} : vector<8x32xf32>, vector<32x32xf32>, vector<8x32xf32> -> vector<8x32xf32>
    %c0_8 = arith.constant 0 : index
    %c0_9 = arith.constant 0 : index
    %8 = vector.load %arg8[%c0_8, %c0_9] : memref<32x32xf32, #tpu.memory_space<vmem>>, vector<32x32xf32>
    %cst_10 = arith.constant dense<0.000000e+00> : vector<8x32xf32>
    %9 = tpu.matmul %3, %8, %cst_10 {dimension_numbers = #tpu.dot_dimension_numbers<[1], [0], [0], [1], [0, 0, 1, 1], [], []>} : vector<8x32xf32>, vector<32x32xf32>, vector<8x32xf32> -> vector<8x32xf32>
    %c0_11 = arith.constant 0 : index
    %c0_12 = arith.constant 0 : index
    %10 = vector.load %arg9[%c0_11, %c0_12] : memref<32x32xf32, #tpu.memory_space<vmem>>, vector<32x32xf32>
    %cst_13 = arith.constant dense<0.000000e+00> : vector<8x32xf32>
    %11 = tpu.matmul %3, %10, %cst_13 {dimension_numbers = #tpu.dot_dimension_numbers<[1], [0], [0], [1], [0, 0, 1, 1], [], []>} : vector<8x32xf32>, vector<32x32xf32>, vector<8x32xf32> -> vector<8x32xf32>
    %12 = vector.extract_strided_slice %7 {offsets = [0, 0], sizes = [8, 8], strides = [1, 1]} : vector<8x32xf32> to vector<8x8xf32>
    %13 = vector.extract_strided_slice %12 {offsets = [0, 0], sizes = [8, 4], strides = [1, 1]} : vector<8x8xf32> to vector<8x4xf32>
    %14 = vector.extract_strided_slice %13 {offsets = [0, 2], sizes = [8, 2], strides = [1, 1]} : vector<8x4xf32> to vector<8x2xf32>
    %cst_14 = arith.constant 0.000000e+00 : f32
    %15 = vector.broadcast %cst_14 : f32 to vector<8x2xf32>
    %16 = arith.subf %15, %14 : vector<8x2xf32>
    %17 = vector.extract_strided_slice %13 {offsets = [0, 0], sizes = [8, 2], strides = [1, 1]} : vector<8x4xf32> to vector<8x2xf32>
    %18 = tpu.concatenate %16, %17 in 1 : vector<8x2xf32>, vector<8x2xf32> -> vector<8x4xf32>
    %19 = arith.mulf %13, %4 : vector<8x4xf32>
    %20 = arith.mulf %18, %5 : vector<8x4xf32>
    %21 = arith.addf %19, %20 : vector<8x4xf32>
    %22 = vector.extract_strided_slice %12 {offsets = [0, 4], sizes = [8, 4], strides = [1, 1]} : vector<8x8xf32> to vector<8x4xf32>
    %23 = tpu.concatenate %21, %22 in 1 : vector<8x4xf32>, vector<8x4xf32> -> vector<8x8xf32>
    %cst_15 = arith.constant 0.353553385 : f32
    %24 = vector.broadcast %cst_15 : f32 to vector<8x8xf32>
    %25 = arith.mulf %23, %24 : vector<8x8xf32>
    %c0_16 = arith.constant 0 : index
    %c0_17 = arith.constant 0 : index
    %c0_18 = arith.constant 0 : index
    %c0_19 = arith.constant 0 : index
    %26 = vector.load %arg10[%c0_16, %c0_17, %c0_18, %c0_19] : memref<1x4x8x8xf32, #tpu.memory_space<vmem>>, vector<1x1x8x8xf32>
    %27 = vector.shape_cast %26 : vector<1x1x8x8xf32> to vector<8x8xf32>
    %28 = vector.shape_cast %25 : vector<8x8xf32> to vector<1x1x8x8xf32>
    tpu.vector_store %arg10[%c0_16, %c0_17, %c0_18, %c0_19], %28 {strides = array<i32>} : memref<1x4x8x8xf32, #tpu.memory_space<vmem>>, vector<1x1x8x8xf32>,
    %29 = vector.extract_strided_slice %9 {offsets = [0, 0], sizes = [8, 8], strides = [1, 1]} : vector<8x32xf32> to vector<8x8xf32>
    %30 = vector.extract_strided_slice %29 {offsets = [0, 0], sizes = [8, 4], strides = [1, 1]} : vector<8x8xf32> to vector<8x4xf32>
    %31 = vector.extract_strided_slice %30 {offsets = [0, 2], sizes = [8, 2], strides = [1, 1]} : vector<8x4xf32> to vector<8x2xf32>
    %cst_20 = arith.constant 0.000000e+00 : f32
    %32 = vector.broadcast %cst_20 : f32 to vector<8x2xf32>
    %33 = arith.subf %32, %31 : vector<8x2xf32>
    %34 = vector.extract_strided_slice %30 {offsets = [0, 0], sizes = [8, 2], strides = [1, 1]} : vector<8x4xf32> to vector<8x2xf32>
    %35 = tpu.concatenate %33, %34 in 1 : vector<8x2xf32>, vector<8x2xf32> -> vector<8x4xf32>
    %36 = arith.mulf %30, %4 : vector<8x4xf32>
    %37 = arith.mulf %35, %5 : vector<8x4xf32>
    %38 = arith.addf %36, %37 : vector<8x4xf32>
    %39 = vector.extract_strided_slice %29 {offsets = [0, 4], sizes = [8, 4], strides = [1, 1]} : vector<8x8xf32> to vector<8x4xf32>
    %40 = tpu.concatenate %38, %39 in 1 : vector<8x4xf32>, vector<8x4xf32> -> vector<8x8xf32>
    %c0_21 = arith.constant 0 : index
    %c0_22 = arith.constant 0 : index
    %c0_23 = arith.constant 0 : index
    %c0_24 = arith.constant 0 : index
    %41 = vector.load %arg11[%c0_21, %c0_22, %c0_23, %c0_24] : memref<1x4x8x8xf32, #tpu.memory_space<vmem>>, vector<1x1x8x8xf32>
    %42 = vector.shape_cast %41 : vector<1x1x8x8xf32> to vector<8x8xf32>
    %43 = vector.shape_cast %40 : vector<8x8xf32> to vector<1x1x8x8xf32>
    tpu.vector_store %arg11[%c0_21, %c0_22, %c0_23, %c0_24], %43 {strides = array<i32>} : memref<1x4x8x8xf32, #tpu.memory_space<vmem>>, vector<1x1x8x8xf32>,
    %44 = vector.extract_strided_slice %11 {offsets = [0, 0], sizes = [8, 8], strides = [1, 1]} : vector<8x32xf32> to vector<8x8xf32>
    %c0_25 = arith.constant 0 : index
    %c0_26 = arith.constant 0 : index
    %c0_27 = arith.constant 0 : index
    %c0_28 = arith.constant 0 : index
    %45 = vector.load %arg12[%c0_25, %c0_26, %c0_27, %c0_28] : memref<1x4x8x8xf32, #tpu.memory_space<vmem>>, vector<1x1x8x8xf32>
    %46 = vector.shape_cast %45 : vector<1x1x8x8xf32> to vector<8x8xf32>
    %47 = vector.shape_cast %44 : vector<8x8xf32> to vector<1x1x8x8xf32>
    tpu.vector_store %arg12[%c0_25, %c0_26, %c0_27, %c0_28], %47 {strides = array<i32>} : memref<1x4x8x8xf32, #tpu.memory_space<vmem>>, vector<1x1x8x8xf32>,
    %48 = vector.extract_strided_slice %7 {offsets = [0, 8], sizes = [8, 8], strides = [1, 1]} : vector<8x32xf32> to vector<8x8xf32>
    %49 = vector.extract_strided_slice %48 {offsets = [0, 0], sizes = [8, 4], strides = [1, 1]} : vector<8x8xf32> to vector<8x4xf32>
    %50 = vector.extract_strided_slice %49 {offsets = [0, 2], sizes = [8, 2], strides = [1, 1]} : vector<8x4xf32> to vector<8x2xf32>
    %cst_29 = arith.constant 0.000000e+00 : f32
    %51 = vector.broadcast %cst_29 : f32 to vector<8x2xf32>
    %52 = arith.subf %51, %50 : vector<8x2xf32>
    %53 = vector.extract_strided_slice %49 {offsets = [0, 0], sizes = [8, 2], strides = [1, 1]} : vector<8x4xf32> to vector<8x2xf32>
    %54 = tpu.concatenate %52, %53 in 1 : vector<8x2xf32>, vector<8x2xf32> -> vector<8x4xf32>
    %55 = arith.mulf %49, %4 : vector<8x4xf32>
    %56 = arith.mulf %54, %5 : vector<8x4xf32>
    %57 = arith.addf %55, %56 : vector<8x4xf32>
    %58 = vector.extract_strided_slice %48 {offsets = [0, 4], sizes = [8, 4], strides = [1, 1]} : vector<8x8xf32> to vector<8x4xf32>
    %59 = tpu.concatenate %57, %58 in 1 : vector<8x4xf32>, vector<8x4xf32> -> vector<8x8xf32>
    %cst_30 = arith.constant 0.353553385 : f32
    %60 = vector.broadcast %cst_30 : f32 to vector<8x8xf32>
    %61 = arith.mulf %59, %60 : vector<8x8xf32>
    %c0_31 = arith.constant 0 : index
    %c1 = arith.constant 1 : index
    %c0_32 = arith.constant 0 : index
    %c0_33 = arith.constant 0 : index
    %62 = vector.load %arg10[%c0_31, %c1, %c0_32, %c0_33] : memref<1x4x8x8xf32, #tpu.memory_space<vmem>>, vector<1x1x8x8xf32>
    %63 = vector.shape_cast %62 : vector<1x1x8x8xf32> to vector<8x8xf32>
    %64 = vector.shape_cast %61 : vector<8x8xf32> to vector<1x1x8x8xf32>
    tpu.vector_store %arg10[%c0_31, %c1, %c0_32, %c0_33], %64 {strides = array<i32>} : memref<1x4x8x8xf32, #tpu.memory_space<vmem>>, vector<1x1x8x8xf32>,
    %65 = vector.extract_strided_slice %9 {offsets = [0, 8], sizes = [8, 8], strides = [1, 1]} : vector<8x32xf32> to vector<8x8xf32>
    %66 = vector.extract_strided_slice %65 {offsets = [0, 0], sizes = [8, 4], strides = [1, 1]} : vector<8x8xf32> to vector<8x4xf32>
    %67 = vector.extract_strided_slice %66 {offsets = [0, 2], sizes = [8, 2], strides = [1, 1]} : vector<8x4xf32> to vector<8x2xf32>
    %cst_34 = arith.constant 0.000000e+00 : f32
    %68 = vector.broadcast %cst_34 : f32 to vector<8x2xf32>
    %69 = arith.subf %68, %67 : vector<8x2xf32>
    %70 = vector.extract_strided_slice %66 {offsets = [0, 0], sizes = [8, 2], strides = [1, 1]} : vector<8x4xf32> to vector<8x2xf32>
    %71 = tpu.concatenate %69, %70 in 1 : vector<8x2xf32>, vector<8x2xf32> -> vector<8x4xf32>
    %72 = arith.mulf %66, %4 : vector<8x4xf32>
    %73 = arith.mulf %71, %5 : vector<8x4xf32>
    %74 = arith.addf %72, %73 : vector<8x4xf32>
    %75 = vector.extract_strided_slice %65 {offsets = [0, 4], sizes = [8, 4], strides = [1, 1]} : vector<8x8xf32> to vector<8x4xf32>
    %76 = tpu.concatenate %74, %75 in 1 : vector<8x4xf32>, vector<8x4xf32> -> vector<8x8xf32>
    %c0_35 = arith.constant 0 : index
    %c1_36 = arith.constant 1 : index
    %c0_37 = arith.constant 0 : index
    %c0_38 = arith.constant 0 : index
    %77 = vector.load %arg11[%c0_35, %c1_36, %c0_37, %c0_38] : memref<1x4x8x8xf32, #tpu.memory_space<vmem>>, vector<1x1x8x8xf32>
    %78 = vector.shape_cast %77 : vector<1x1x8x8xf32> to vector<8x8xf32>
    %79 = vector.shape_cast %76 : vector<8x8xf32> to vector<1x1x8x8xf32>
    tpu.vector_store %arg11[%c0_35, %c1_36, %c0_37, %c0_38], %79 {strides = array<i32>} : memref<1x4x8x8xf32, #tpu.memory_space<vmem>>, vector<1x1x8x8xf32>,
    %80 = vector.extract_strided_slice %11 {offsets = [0, 8], sizes = [8, 8], strides = [1, 1]} : vector<8x32xf32> to vector<8x8xf32>
    %c0_39 = arith.constant 0 : index
    %c1_40 = arith.constant 1 : index
    %c0_41 = arith.constant 0 : index
    %c0_42 = arith.constant 0 : index
    %81 = vector.load %arg12[%c0_39, %c1_40, %c0_41, %c0_42] : memref<1x4x8x8xf32, #tpu.memory_space<vmem>>, vector<1x1x8x8xf32>
    %82 = vector.shape_cast %81 : vector<1x1x8x8xf32> to vector<8x8xf32>
    %83 = vector.shape_cast %80 : vector<8x8xf32> to vector<1x1x8x8xf32>
    tpu.vector_store %arg12[%c0_39, %c1_40, %c0_41, %c0_42], %83 {strides = array<i32>} : memref<1x4x8x8xf32, #tpu.memory_space<vmem>>, vector<1x1x8x8xf32>,
    %84 = vector.extract_strided_slice %7 {offsets = [0, 16], sizes = [8, 8], strides = [1, 1]} : vector<8x32xf32> to vector<8x8xf32>
    %85 = vector.extract_strided_slice %84 {offsets = [0, 0], sizes = [8, 4], strides = [1, 1]} : vector<8x8xf32> to vector<8x4xf32>
    %86 = vector.extract_strided_slice %85 {offsets = [0, 2], sizes = [8, 2], strides = [1, 1]} : vector<8x4xf32> to vector<8x2xf32>
    %cst_43 = arith.constant 0.000000e+00 : f32
    %87 = vector.broadcast %cst_43 : f32 to vector<8x2xf32>
    %88 = arith.subf %87, %86 : vector<8x2xf32>
    %89 = vector.extract_strided_slice %85 {offsets = [0, 0], sizes = [8, 2], strides = [1, 1]} : vector<8x4xf32> to vector<8x2xf32>
    %90 = tpu.concatenate %88, %89 in 1 : vector<8x2xf32>, vector<8x2xf32> -> vector<8x4xf32>
    %91 = arith.mulf %85, %4 : vector<8x4xf32>
    %92 = arith.mulf %90, %5 : vector<8x4xf32>
    %93 = arith.addf %91, %92 : vector<8x4xf32>
    %94 = vector.extract_strided_slice %84 {offsets = [0, 4], sizes = [8, 4], strides = [1, 1]} : vector<8x8xf32> to vector<8x4xf32>
    %95 = tpu.concatenate %93, %94 in 1 : vector<8x4xf32>, vector<8x4xf32> -> vector<8x8xf32>
    %cst_44 = arith.constant 0.353553385 : f32
    %96 = vector.broadcast %cst_44 : f32 to vector<8x8xf32>
    %97 = arith.mulf %95, %96 : vector<8x8xf32>
    %c0_45 = arith.constant 0 : index
    %c2 = arith.constant 2 : index
    %c0_46 = arith.constant 0 : index
    %c0_47 = arith.constant 0 : index
    %98 = vector.load %arg10[%c0_45, %c2, %c0_46, %c0_47] : memref<1x4x8x8xf32, #tpu.memory_space<vmem>>, vector<1x1x8x8xf32>
    %99 = vector.shape_cast %98 : vector<1x1x8x8xf32> to vector<8x8xf32>
    %100 = vector.shape_cast %97 : vector<8x8xf32> to vector<1x1x8x8xf32>
    tpu.vector_store %arg10[%c0_45, %c2, %c0_46, %c0_47], %100 {strides = array<i32>} : memref<1x4x8x8xf32, #tpu.memory_space<vmem>>, vector<1x1x8x8xf32>,
    %101 = vector.extract_strided_slice %9 {offsets = [0, 16], sizes = [8, 8], strides = [1, 1]} : vector<8x32xf32> to vector<8x8xf32>
    %102 = vector.extract_strided_slice %101 {offsets = [0, 0], sizes = [8, 4], strides = [1, 1]} : vector<8x8xf32> to vector<8x4xf32>
    %103 = vector.extract_strided_slice %102 {offsets = [0, 2], sizes = [8, 2], strides = [1, 1]} : vector<8x4xf32> to vector<8x2xf32>
    %cst_48 = arith.constant 0.000000e+00 : f32
    %104 = vector.broadcast %cst_48 : f32 to vector<8x2xf32>
    %105 = arith.subf %104, %103 : vector<8x2xf32>
    %106 = vector.extract_strided_slice %102 {offsets = [0, 0], sizes = [8, 2], strides = [1, 1]} : vector<8x4xf32> to vector<8x2xf32>
    %107 = tpu.concatenate %105, %106 in 1 : vector<8x2xf32>, vector<8x2xf32> -> vector<8x4xf32>
    %108 = arith.mulf %102, %4 : vector<8x4xf32>
    %109 = arith.mulf %107, %5 : vector<8x4xf32>
    %110 = arith.addf %108, %109 : vector<8x4xf32>
    %111 = vector.extract_strided_slice %101 {offsets = [0, 4], sizes = [8, 4], strides = [1, 1]} : vector<8x8xf32> to vector<8x4xf32>
    %112 = tpu.concatenate %110, %111 in 1 : vector<8x4xf32>, vector<8x4xf32> -> vector<8x8xf32>
    %c0_49 = arith.constant 0 : index
    %c2_50 = arith.constant 2 : index
    %c0_51 = arith.constant 0 : index
    %c0_52 = arith.constant 0 : index
    %113 = vector.load %arg11[%c0_49, %c2_50, %c0_51, %c0_52] : memref<1x4x8x8xf32, #tpu.memory_space<vmem>>, vector<1x1x8x8xf32>
    %114 = vector.shape_cast %113 : vector<1x1x8x8xf32> to vector<8x8xf32>
    %115 = vector.shape_cast %112 : vector<8x8xf32> to vector<1x1x8x8xf32>
    tpu.vector_store %arg11[%c0_49, %c2_50, %c0_51, %c0_52], %115 {strides = array<i32>} : memref<1x4x8x8xf32, #tpu.memory_space<vmem>>, vector<1x1x8x8xf32>,
    %116 = vector.extract_strided_slice %11 {offsets = [0, 16], sizes = [8, 8], strides = [1, 1]} : vector<8x32xf32> to vector<8x8xf32>
    %c0_53 = arith.constant 0 : index
    %c2_54 = arith.constant 2 : index
    %c0_55 = arith.constant 0 : index
    %c0_56 = arith.constant 0 : index
    %117 = vector.load %arg12[%c0_53, %c2_54, %c0_55, %c0_56] : memref<1x4x8x8xf32, #tpu.memory_space<vmem>>, vector<1x1x8x8xf32>
    %118 = vector.shape_cast %117 : vector<1x1x8x8xf32> to vector<8x8xf32>
    %119 = vector.shape_cast %116 : vector<8x8xf32> to vector<1x1x8x8xf32>
    tpu.vector_store %arg12[%c0_53, %c2_54, %c0_55, %c0_56], %119 {strides = array<i32>} : memref<1x4x8x8xf32, #tpu.memory_space<vmem>>, vector<1x1x8x8xf32>,
    %120 = vector.extract_strided_slice %7 {offsets = [0, 24], sizes = [8, 8], strides = [1, 1]} : vector<8x32xf32> to vector<8x8xf32>
    %121 = vector.extract_strided_slice %120 {offsets = [0, 0], sizes = [8, 4], strides = [1, 1]} : vector<8x8xf32> to vector<8x4xf32>
    %122 = vector.extract_strided_slice %121 {offsets = [0, 2], sizes = [8, 2], strides = [1, 1]} : vector<8x4xf32> to vector<8x2xf32>
    %cst_57 = arith.constant 0.000000e+00 : f32
    %123 = vector.broadcast %cst_57 : f32 to vector<8x2xf32>
    %124 = arith.subf %123, %122 : vector<8x2xf32>
    %125 = vector.extract_strided_slice %121 {offsets = [0, 0], sizes = [8, 2], strides = [1, 1]} : vector<8x4xf32> to vector<8x2xf32>
    %126 = tpu.concatenate %124, %125 in 1 : vector<8x2xf32>, vector<8x2xf32> -> vector<8x4xf32>
    %127 = arith.mulf %121, %4 : vector<8x4xf32>
    %128 = arith.mulf %126, %5 : vector<8x4xf32>
    %129 = arith.addf %127, %128 : vector<8x4xf32>
    %130 = vector.extract_strided_slice %120 {offsets = [0, 4], sizes = [8, 4], strides = [1, 1]} : vector<8x8xf32> to vector<8x4xf32>
    %131 = tpu.concatenate %129, %130 in 1 : vector<8x4xf32>, vector<8x4xf32> -> vector<8x8xf32>
    %cst_58 = arith.constant 0.353553385 : f32
    %132 = vector.broadcast %cst_58 : f32 to vector<8x8xf32>
    %133 = arith.mulf %131, %132 : vector<8x8xf32>
    %c0_59 = arith.constant 0 : index
    %c3 = arith.constant 3 : index
    %c0_60 = arith.constant 0 : index
    %c0_61 = arith.constant 0 : index
    %134 = vector.load %arg10[%c0_59, %c3, %c0_60, %c0_61] : memref<1x4x8x8xf32, #tpu.memory_space<vmem>>, vector<1x1x8x8xf32>
    %135 = vector.shape_cast %134 : vector<1x1x8x8xf32> to vector<8x8xf32>
    %136 = vector.shape_cast %133 : vector<8x8xf32> to vector<1x1x8x8xf32>
    tpu.vector_store %arg10[%c0_59, %c3, %c0_60, %c0_61], %136 {strides = array<i32>} : memref<1x4x8x8xf32, #tpu.memory_space<vmem>>, vector<1x1x8x8xf32>,
    %137 = vector.extract_strided_slice %9 {offsets = [0, 24], sizes = [8, 8], strides = [1, 1]} : vector<8x32xf32> to vector<8x8xf32>
    %138 = vector.extract_strided_slice %137 {offsets = [0, 0], sizes = [8, 4], strides = [1, 1]} : vector<8x8xf32> to vector<8x4xf32>
    %139 = vector.extract_strided_slice %138 {offsets = [0, 2], sizes = [8, 2], strides = [1, 1]} : vector<8x4xf32> to vector<8x2xf32>
    %cst_62 = arith.constant 0.000000e+00 : f32
    %140 = vector.broadcast %cst_62 : f32 to vector<8x2xf32>
    %141 = arith.subf %140, %139 : vector<8x2xf32>
    %142 = vector.extract_strided_slice %138 {offsets = [0, 0], sizes = [8, 2], strides = [1, 1]} : vector<8x4xf32> to vector<8x2xf32>
    %143 = tpu.concatenate %141, %142 in 1 : vector<8x2xf32>, vector<8x2xf32> -> vector<8x4xf32>
    %144 = arith.mulf %138, %4 : vector<8x4xf32>
    %145 = arith.mulf %143, %5 : vector<8x4xf32>
    %146 = arith.addf %144, %145 : vector<8x4xf32>
    %147 = vector.extract_strided_slice %137 {offsets = [0, 4], sizes = [8, 4], strides = [1, 1]} : vector<8x8xf32> to vector<8x4xf32>
    %148 = tpu.concatenate %146, %147 in 1 : vector<8x4xf32>, vector<8x4xf32> -> vector<8x8xf32>
    %c0_63 = arith.constant 0 : index
    %c3_64 = arith.constant 3 : index
    %c0_65 = arith.constant 0 : index
    %c0_66 = arith.constant 0 : index
    %149 = vector.load %arg11[%c0_63, %c3_64, %c0_65, %c0_66] : memref<1x4x8x8xf32, #tpu.memory_space<vmem>>, vector<1x1x8x8xf32>
    %150 = vector.shape_cast %149 : vector<1x1x8x8xf32> to vector<8x8xf32>
    %151 = vector.shape_cast %148 : vector<8x8xf32> to vector<1x1x8x8xf32>
    tpu.vector_store %arg11[%c0_63, %c3_64, %c0_65, %c0_66], %151 {strides = array<i32>} : memref<1x4x8x8xf32, #tpu.memory_space<vmem>>, vector<1x1x8x8xf32>,
    %152 = vector.extract_strided_slice %11 {offsets = [0, 24], sizes = [8, 8], strides = [1, 1]} : vector<8x32xf32> to vector<8x8xf32>
    %c0_67 = arith.constant 0 : index
    %c3_68 = arith.constant 3 : index
    %c0_69 = arith.constant 0 : index
    %c0_70 = arith.constant 0 : index
    %153 = vector.load %arg12[%c0_67, %c3_68, %c0_69, %c0_70] : memref<1x4x8x8xf32, #tpu.memory_space<vmem>>, vector<1x1x8x8xf32>
    %154 = vector.shape_cast %153 : vector<1x1x8x8xf32> to vector<8x8xf32>
    %155 = vector.shape_cast %152 : vector<8x8xf32> to vector<1x1x8x8xf32>
    tpu.vector_store %arg12[%c0_67, %c3_68, %c0_69, %c0_70], %155 {strides = array<i32>} : memref<1x4x8x8xf32, #tpu.memory_space<vmem>>, vector<1x1x8x8xf32>,
    return
  }
  func.func @transform_0(%arg0: i32, %arg1: i32, %arg2: i32) -> (i32, i32, i32) {
    %c0_i32 = arith.constant 0 : i32
    %c0_i32_0 = arith.constant 0 : i32
    return %arg0, %arg1, %c0_i32 : i32, i32, i32
  }
  func.func @transform_1(%arg0: i32, %arg1: i32, %arg2: i32) -> (i32, i32) {
    %c0_i32 = arith.constant 0 : i32
    %c0_i32_0 = arith.constant 0 : i32
    %c0_i32_1 = arith.constant 0 : i32
    return %c0_i32, %c0_i32_0 : i32, i32
  }
  func.func @transform_2(%arg0: i32, %arg1: i32, %arg2: i32) -> (i32, i32) {
    %c0_i32 = arith.constant 0 : i32
    %c0_i32_0 = arith.constant 0 : i32
    return %arg1, %c0_i32 : i32, i32
  }
  func.func @transform_3(%arg0: i32, %arg1: i32, %arg2: i32) -> (i32, i32) {
    %c0_i32 = arith.constant 0 : i32
    %c0_i32_0 = arith.constant 0 : i32
    return %arg1, %c0_i32 : i32, i32
  }
  func.func @transform_4(%arg0: i32, %arg1: i32, %arg2: i32) -> (i32, i32) {
    %c0_i32 = arith.constant 0 : i32
    %c0_i32_0 = arith.constant 0 : i32
    return %c0_i32, %arg2 : i32, i32
  }
  func.func @transform_5(%arg0: i32, %arg1: i32, %arg2: i32) -> (i32, i32) {
    %c0_i32 = arith.constant 0 : i32
    %c0_i32_0 = arith.constant 0 : i32
    return %c0_i32, %arg2 : i32, i32
  }
  func.func @transform_6(%arg0: i32, %arg1: i32, %arg2: i32) -> (i32, i32) {
    %c0_i32 = arith.constant 0 : i32
    %c0_i32_0 = arith.constant 0 : i32
    return %c0_i32, %arg2 : i32, i32
  }
  func.func @transform_7(%arg0: i32, %arg1: i32, %arg2: i32) -> (i32, i32, i32, i32) {
    %c0_i32 = arith.constant 0 : i32
    %c0_i32_0 = arith.constant 0 : i32
    return %arg0, %arg2, %arg1, %c0_i32 : i32, i32, i32, i32
  }
  func.func @transform_8(%arg0: i32, %arg1: i32, %arg2: i32) -> (i32, i32, i32, i32) {
    %c0_i32 = arith.constant 0 : i32
    %c0_i32_0 = arith.constant 0 : i32
    return %arg0, %arg2, %arg1, %c0_i32 : i32, i32, i32, i32
  }
  func.func @transform_9(%arg0: i32, %arg1: i32, %arg2: i32) -> (i32, i32, i32, i32) {
    %c0_i32 = arith.constant 0 : i32
    %c0_i32_0 = arith.constant 0 : i32
    return %arg0, %arg2, %arg1, %c0_i32 : i32, i32, i32, i32
  }
}

</mosaic_0001>

<llo_original>
// kernel: tpu_custom_call.1
$region0: #{tpu_custom_call.1}
  #allocation0 [shape = 'u32[]', space=smem, size = 0x4, offset = 0x4, fixed_abs, tag = 'smem constant byte address 0x4 - core index']
  #allocation1 [shape = 'u32[144,128]{1,0:T(1,128)}', space=vmem, size = 0x12000, scoped, tag = 'internal scratch']
  #allocation2 [shape = 'f32[8,32]{1,0:T(8,128)}', space=vmem, size = 0x1000, scoped, tag = 'scratch operand']
  %s0 = inlined_call_operand.hbm [shape: f32[2,8,32], index: 0, kind: input, shape index: {}]
  %s1 = inlined_call_operand.hbm [shape: f32[1,32], index: 1, kind: input, shape index: {}]
  %s2 = inlined_call_operand.hbm [shape: f32[8,4], index: 2, kind: input, shape index: {}]
  %s3 = inlined_call_operand.hbm [shape: f32[8,4], index: 3, kind: input, shape index: {}]
  %s4 = inlined_call_operand.hbm [shape: f32[32,32], index: 4, kind: input, shape index: {}]
  %s5 = inlined_call_operand.hbm [shape: f32[32,32], index: 5, kind: input, shape index: {}]
  %s6 = inlined_call_operand.hbm [shape: f32[32,32], index: 6, kind: input, shape index: {}]
  %s7 = inlined_call_operand.hbm [shape: f32[2,4,8,8], index: 7, kind: output, shape index: {0}]
  %s8 = inlined_call_operand.hbm [shape: f32[2,4,8,8], index: 8, kind: output, shape index: {1}]
  %s9 = inlined_call_operand.hbm [shape: f32[2,4,8,8], index: 9, kind: output, shape index: {2}]
  %10 = xla_tuple %s7, %s8, %s9
  %s11 = sld [smem:[#allocation0]]
  $region109: #{tpu_custom_call.1} parent=0
    _
  %s13 = ssub.s32 1, %s11
  %s14 = scalar_select 0, %s13, %s11
  $region1: #{tpu_custom_call.1} parent=0
    #allocation3 [shape = 'u8[8192]{0}', space=vmem, size = 0x2000, scoped, tag = 'input window, operand 0']
    #allocation4 [shape = 's32[2]{0}', space=sflag, size = 0x8, scoped, tag = 'scoped memory for tpu_custom_call.1']
    #allocation5 [shape = 's32[2]{0}', space=sflag, size = 0x8, scoped, tag = 'scoped memory for tpu_custom_call.1']
    #allocation6 [shape = 'u8[512]{0}', space=vmem, size = 0x400, scoped, tag = 'input window, operand 1, single buffered']
    #allocation7 [shape = 's32[1]{0}', space=sflag, size = 0x4, scoped, tag = 'scoped memory for tpu_custom_call.1']
    #allocation8 [shape = 'u8[4096]{0}', space=vmem, size = 0x1000, scoped, tag = 'input window, operand 2, single buffered']
    #allocation9 [shape = 'u8[4096]{0}', space=vmem, size = 0x1000, scoped, tag = 'input window, operand 3, single buffered']
    #allocation10 [shape = 's32[1]{0}', space=sflag, size = 0x4, scoped, tag = 'scoped memory for tpu_custom_call.1']
    #allocation11 [shape = 'u8[16384]{0}', space=vmem, size = 0x4000, scoped, tag = 'input window, operand 4, single buffered']
    #allocation12 [shape = 'u8[16384]{0}', space=vmem, size = 0x4000, scoped, tag = 'input window, operand 5, single buffered']
    #allocation13 [shape = 's32[1]{0}', space=sflag, size = 0x4, scoped, tag = 'scoped memory for tpu_custom_call.1']
    #allocation14 [shape = 'u8[16384]{0}', space=vmem, size = 0x4000, scoped, tag = 'input window, operand 6, single buffered']
    #allocation15 [shape = 'u8[32768]{0}', space=vmem, size = 0x8000, scoped, tag = 'output window, operand 0']
    #allocation16 [shape = 'u8[32768]{0}', space=vmem, size = 0x8000, scoped, tag = 'output window, operand 1']
    #allocation17 [shape = 's32[2]{0}', space=sflag, size = 0x8, scoped, tag = 'scoped memory for tpu_custom_call.1']
    #allocation18 [shape = 'u8[32768]{0}', space=vmem, size = 0x8000, scoped, tag = 'output window, operand 2']
    %15 = vsyncpa [#allocation4], 0
    %s16 = scalar_lea.sflag [#allocation4], 1
    %17 = vsyncpa %s16, 0
    %18 = vsyncpa [#allocation7], 0
    %19 = vsyncpa [#allocation10], 0
    %20 = vsyncpa [#allocation13], 0
    %21 = vsyncpa [#allocation5], 0
    %s22 = scalar_lea.sflag [#allocation5], 1
    %23 = vsyncpa %s22, 0
    %24 = vsyncpa [#allocation17], 0
    %s25 = scalar_lea.sflag [#allocation17], 1
    %26 = vsyncpa %s25, 0
    loop: start=0, step=1, limit=4
    $region2: #{tpu_custom_call.1} parent=1 // loop_pre_header
      _
    $region3: #{tpu_custom_call.1} parent=1 // loop_header
      %s28 = sphi 0, %s32
      %p29 = scmp.ge.s32.totalorder %s28, 4
      %s35 = sphi 0, %s54
      %s36 = sphi 0, %s50
      %s37 = sphi 0, %s46
      %s38 = sphi 0, %s35
      %s39 = sphi 0, %s36
      %s40 = sphi 0, %s37
      %s41 = sphi 0, %s38
      %s42 = sphi 0, %s39
      %s43 = sphi 0, %s40
      %s59 = sphi 0, %s61
      %s62 = sphi 0, %s59
      %s63 = sphi 0, %s62
      %s79 = sphi 0, %s63
      %s83 = sphi 0, %s83
      %s85 = sphi 0, %s83
      %s86 = sphi 0, %s85
      %s100 = sphi 0, %s86
      %s106 = sphi 0, %s108
      %s109 = sphi 0, %s106
      %s110 = sphi 0, %s109
      %s126 = sphi 0, %s110
      %s132 = sphi 0, %s134
      %s135 = sphi 0, %s132
      %s136 = sphi 0, %s135
      %s152 = sphi 0, %s136
      %s158 = sphi 0, %s160
      %s161 = sphi 0, %s158
      %s162 = sphi 0, %s161
      %s178 = sphi 0, %s162
      %s184 = sphi 0, %s186
      %s187 = sphi 0, %s184
      %s188 = sphi 0, %s187
      %s204 = sphi 0, %s188
      %s210 = sphi 0, %s212
      %s213 = sphi 0, %s210
      %s214 = sphi 0, %s213
      %s230 = sphi 0, %s214
      %s240 = sphi 0, %s242
      %s243 = sphi 0, %s240
      %s244 = sphi 0, %s243
      %s260 = sphi 0, %s244
      %s270 = sphi 0, %s272
      %s273 = sphi 0, %s270
      %s274 = sphi 0, %s273
      %s290 = sphi 0, %s274
      %s300 = sphi 0, %s302
      %s303 = sphi 0, %s300
      %s304 = sphi 0, %s303
      %s320 = sphi 0, %s304
    $region4: #{tpu_custom_call.1} parent=1 // loop_header_branch
      %31 = sbr.rel (%p29) target = $region8
    $region5: #{tpu_custom_call.1} parent=1 // loop_body
      %s33 = ssub.s32 %s28, 1
      %s34 = ssub.s32 %s28, 2
      %s44 = sadd.s32 1, %s37
      %p45 = scmp.ge.s32.totalorder %s44, 1
      %s46 = scalar_select %p45, 0, %s44
      %s47 = sadd.s32 1, %s36
      %s48 = scalar_select %p45, %s47, %s36
      %p49 = scmp.ge.s32.totalorder %s48, 1
      %s50 = scalar_select %p49, 0, %s48
      %s51 = sadd.s32 1, %s35
      %s52 = scalar_select %p49, %s51, %s35
      %p53 = scmp.ge.s32.totalorder %s52, 2
      %s54 = scalar_select %p53, 0, %s52
      %s55 = ssub.s32 %s35, %s54
      %s56 = ssub.s32 %s36, %s50
      %s57 = sor.u32 %s55, %s56
      %p58 = scmp.eq.s32.totalorder %s57, 0
      %s60 = sadd.s32 %s59, 1
      %s61 = scalar_select %p58, %s59, %s60
      %p64 = pneg %p58
      %p65 = scmp.eq.s32.totalorder %s28, 1
      %p66 = por %p64, %p65
      %p67 = scmp.ne.s32.totalorder %s59, %s62
      %p68 = scmp.eq.s32.totalorder %s28, 0
      %p69 = por %p67, %p68
      %p70 = scmp.ne.s32.totalorder %s59, %s62
      %p71 = scmp.eq.s32.totalorder %s33, 1
      %p72 = por %p70, %p71
      %p73 = scmp.ne.s32.totalorder %s62, %s63
      %p74 = scmp.eq.s32.totalorder %s33, 0
      %p75 = por %p73, %p74
      %p76 = scmp.ne.s32.totalorder %s62, %s63
      %p77 = scmp.eq.s32.totalorder %s34, 1
      %p78 = por %p76, %p77
      %p80 = scmp.ne.s32.totalorder %s63, %s79
      %p81 = scmp.eq.s32.totalorder %s34, 0
      %p82 = por %p80, %p81
      %s84 = sadd.s32 %s83, 1
      %p87 = scmp.eq.s32.totalorder %s28, 1
      %p88 = scmp.ne.s32.totalorder %s83, %s85
      %p89 = scmp.eq.s32.totalorder %s28, 0
      %p90 = por %p88, %p89
      %p91 = scmp.ne.s32.totalorder %s83, %s85
      %p92 = scmp.eq.s32.totalorder %s33, 1
      %p93 = por %p91, %p92
      %p94 = scmp.ne.s32.totalorder %s85, %s86
      %p95 = scmp.eq.s32.totalorder %s33, 0
      %p96 = por %p94, %p95
      %p97 = scmp.ne.s32.totalorder %s85, %s86
      %p98 = scmp.eq.s32.totalorder %s34, 1
      %p99 = por %p97, %p98
      %p101 = scmp.ne.s32.totalorder %s86, %s100
      %p102 = scmp.eq.s32.totalorder %s34, 0
      %p103 = por %p101, %p102
      %s104 = ssub.s32 %s36, %s50
      %p105 = scmp.eq.s32.totalorder %s104, 0
      %s107 = sadd.s32 %s106, 1
      %s108 = scalar_select %p105, %s106, %s107
      %p111 = pneg %p105
      %p112 = scmp.eq.s32.totalorder %s28, 1
      %p113 = por %p111, %p112
      %p114 = scmp.ne.s32.totalorder %s106, %s109
      %p115 = scmp.eq.s32.totalorder %s28, 0
      %p116 = por %p114, %p115
      %p117 = scmp.ne.s32.totalorder %s106, %s109
      %p118 = scmp.eq.s32.totalorder %s33, 1
      %p119 = por %p117, %p118
      %p120 = scmp.ne.s32.totalorder %s109, %s110
      %p121 = scmp.eq.s32.totalorder %s33, 0
      %p122 = por %p120, %p121
      %p123 = scmp.ne.s32.totalorder %s109, %s110
      %p124 = scmp.eq.s32.totalorder %s34, 1
      %p125 = por %p123, %p124
      %p127 = scmp.ne.s32.totalorder %s110, %s126
      %p128 = scmp.eq.s32.totalorder %s34, 0
      %p129 = por %p127, %p128
      %s130 = ssub.s32 %s36, %s50
      %p131 = scmp.eq.s32.totalorder %s130, 0
      %s133 = sadd.s32 %s132, 1
      %s134 = scalar_select %p131, %s132, %s133
      %p137 = pneg %p131
      %p138 = scmp.eq.s32.totalorder %s28, 1
      %p139 = por %p137, %p138
      %p140 = scmp.ne.s32.totalorder %s132, %s135
      %p141 = scmp.eq.s32.totalorder %s28, 0
      %p142 = por %p140, %p141
      %p143 = scmp.ne.s32.totalorder %s132, %s135
      %p144 = scmp.eq.s32.totalorder %s33, 1
      %p145 = por %p143, %p144
      %p146 = scmp.ne.s32.totalorder %s135, %s136
      %p147 = scmp.eq.s32.totalorder %s33, 0
      %p148 = por %p146, %p147
      %p149 = scmp.ne.s32.totalorder %s135, %s136
      %p150 = scmp.eq.s32.totalorder %s34, 1
      %p151 = por %p149, %p150
      %p153 = scmp.ne.s32.totalorder %s136, %s152
      %p154 = scmp.eq.s32.totalorder %s34, 0
      %p155 = por %p153, %p154
      %s156 = ssub.s32 %s37, %s46
      %p157 = scmp.eq.s32.totalorder %s156, 0
      %s159 = sadd.s32 %s158, 1
      %s160 = scalar_select %p157, %s158, %s159
      %p163 = pneg %p157
      %p164 = scmp.eq.s32.totalorder %s28, 1
      %p165 = por %p163, %p164
      %p166 = scmp.ne.s32.totalorder %s158, %s161
      %p167 = scmp.eq.s32.totalorder %s28, 0
      %p168 = por %p166, %p167
      %p169 = scmp.ne.s32.totalorder %s158, %s161
      %p170 = scmp.eq.s32.totalorder %s33, 1
      %p171 = por %p169, %p170
      %p172 = scmp.ne.s32.totalorder %s161, %s162
      %p173 = scmp.eq.s32.totalorder %s33, 0
      %p174 = por %p172, %p173
      %p175 = scmp.ne.s32.totalorder %s161, %s162
      %p176 = scmp.eq.s32.totalorder %s34, 1
      %p177 = por %p175, %p176
      %p179 = scmp.ne.s32.totalorder %s162, %s178
      %p180 = scmp.eq.s32.totalorder %s34, 0
      %p181 = por %p179, %p180
      %s182 = ssub.s32 %s37, %s46
      %p183 = scmp.eq.s32.totalorder %s182, 0
      %s185 = sadd.s32 %s184, 1
      %s186 = scalar_select %p183, %s184, %s185
      %p189 = pneg %p183
      %p190 = scmp.eq.s32.totalorder %s28, 1
      %p191 = por %p189, %p190
      %p192 = scmp.ne.s32.totalorder %s184, %s187
      %p193 = scmp.eq.s32.totalorder %s28, 0
      %p194 = por %p192, %p193
      %p195 = scmp.ne.s32.totalorder %s184, %s187
      %p196 = scmp.eq.s32.totalorder %s33, 1
      %p197 = por %p195, %p196
      %p198 = scmp.ne.s32.totalorder %s187, %s188
      %p199 = scmp.eq.s32.totalorder %s33, 0
      %p200 = por %p198, %p199
      %p201 = scmp.ne.s32.totalorder %s187, %s188
      %p202 = scmp.eq.s32.totalorder %s34, 1
      %p203 = por %p201, %p202
      %p205 = scmp.ne.s32.totalorder %s188, %s204
      %p206 = scmp.eq.s32.totalorder %s34, 0
      %p207 = por %p205, %p206
      %s208 = ssub.s32 %s37, %s46
      %p209 = scmp.eq.s32.totalorder %s208, 0
      %s211 = sadd.s32 %s210, 1
      %s212 = scalar_select %p209, %s210, %s211
      %p215 = pneg %p209
      %p216 = scmp.eq.s32.totalorder %s28, 1
      %p217 = por %p215, %p216
      %p218 = scmp.ne.s32.totalorder %s210, %s213
      %p219 = scmp.eq.s32.totalorder %s28, 0
      %p220 = por %p218, %p219
      %p221 = scmp.ne.s32.totalorder %s210, %s213
      %p222 = scmp.eq.s32.totalorder %s33, 1
      %p223 = por %p221, %p222
      %p224 = scmp.ne.s32.totalorder %s213, %s214
      %p225 = scmp.eq.s32.totalorder %s33, 0
      %p226 = por %p224, %p225
      %p227 = scmp.ne.s32.totalorder %s213, %s214
      %p228 = scmp.eq.s32.totalorder %s34, 1
      %p229 = por %p227, %p228
      %p231 = scmp.ne.s32.totalorder %s214, %s230
      %p232 = scmp.eq.s32.totalorder %s34, 0
      %p233 = por %p231, %p232
      %s234 = ssub.s32 %s35, %s54
      %s235 = ssub.s32 %s37, %s46
      %s236 = sor.u32 %s234, %s235
      %s237 = ssub.s32 %s36, %s50
      %s238 = sor.u32 %s236, %s237
      %p239 = scmp.eq.s32.totalorder %s238, 0
      %s241 = sadd.s32 %s240, 1
      %s242 = scalar_select %p239, %s240, %s241
      %p245 = pneg %p239
      %p246 = scmp.eq.s32.totalorder %s28, 1
      %p247 = por %p245, %p246
      %p248 = scmp.ne.s32.totalorder %s240, %s243
      %p249 = scmp.eq.s32.totalorder %s28, 0
      %p250 = por %p248, %p249
      %p251 = scmp.ne.s32.totalorder %s240, %s243
      %p252 = scmp.eq.s32.totalorder %s33, 1
      %p253 = por %p251, %p252
      %p254 = scmp.ne.s32.totalorder %s243, %s244
      %p255 = scmp.eq.s32.totalorder %s33, 0
      %p256 = por %p254, %p255
      %p257 = scmp.ne.s32.totalorder %s243, %s244
      %p258 = scmp.eq.s32.totalorder %s34, 1
      %p259 = por %p257, %p258
      %p261 = scmp.ne.s32.totalorder %s244, %s260
      %p262 = scmp.eq.s32.totalorder %s34, 0
      %p263 = por %p261, %p262
      %s264 = ssub.s32 %s35, %s54
      %s265 = ssub.s32 %s37, %s46
      %s266 = sor.u32 %s264, %s265
      %s267 = ssub.s32 %s36, %s50
      %s268 = sor.u32 %s266, %s267
      %p269 = scmp.eq.s32.totalorder %s268, 0
      %s271 = sadd.s32 %s270, 1
      %s272 = scalar_select %p269, %s270, %s271
      %p275 = pneg %p269
      %p276 = scmp.eq.s32.totalorder %s28, 1
      %p277 = por %p275, %p276
      %p278 = scmp.ne.s32.totalorder %s270, %s273
      %p279 = scmp.eq.s32.totalorder %s28, 0
      %p280 = por %p278, %p279
      %p281 = scmp.ne.s32.totalorder %s270, %s273
      %p282 = scmp.eq.s32.totalorder %s33, 1
      %p283 = por %p281, %p282
      %p284 = scmp.ne.s32.totalorder %s273, %s274
      %p285 = scmp.eq.s32.totalorder %s33, 0
      %p286 = por %p284, %p285
      %p287 = scmp.ne.s32.totalorder %s273, %s274
      %p288 = scmp.eq.s32.totalorder %s34, 1
      %p289 = por %p287, %p288
      %p291 = scmp.ne.s32.totalorder %s274, %s290
      %p292 = scmp.eq.s32.totalorder %s34, 0
      %p293 = por %p291, %p292
      %s294 = ssub.s32 %s35, %s54
      %s295 = ssub.s32 %s37, %s46
      %s296 = sor.u32 %s294, %s295
      %s297 = ssub.s32 %s36, %s50
      %s298 = sor.u32 %s296, %s297
      %p299 = scmp.eq.s32.totalorder %s298, 0
      %s301 = sadd.s32 %s300, 1
      %s302 = scalar_select %p299, %s300, %s301
      %p305 = pneg %p299
      %p306 = scmp.eq.s32.totalorder %s28, 1
      %p307 = por %p305, %p306
      %p308 = scmp.ne.s32.totalorder %s300, %s303
      %p309 = scmp.eq.s32.totalorder %s28, 0
      %p310 = por %p308, %p309
      %p311 = scmp.ne.s32.totalorder %s300, %s303
      %p312 = scmp.eq.s32.totalorder %s33, 1
      %p313 = por %p311, %p312
      %p314 = scmp.ne.s32.totalorder %s303, %s304
      %p315 = scmp.eq.s32.totalorder %s33, 0
      %p316 = por %p314, %p315
      %p317 = scmp.ne.s32.totalorder %s303, %s304
      %p318 = scmp.eq.s32.totalorder %s34, 1
      %p319 = por %p317, %p318
      %p321 = scmp.ne.s32.totalorder %s304, %s320
      %p322 = scmp.eq.s32.totalorder %s34, 0
      %p323 = por %p321, %p322
      %p324 = scmp.le.s32.totalorder 1, %s28
      %p325 = scmp.lt.s32.totalorder %s28, 3
      %p326 = pnand %p324, %p325
      %p327 = pneg %p326
      // Predicated region
      $region9: #{tpu_custom_call.1} parent=5 // pred_check
        _
      $region10: #{tpu_custom_call.1} parent=5 // pred_check_branch
        %329 = sbr.rel (%p326) target = $region12
      $region11: #{tpu_custom_call.1} parent=5 // pred_region
        %s330 = ssub.s32 %s28, 1
        // Predicated region
        $region13: #{tpu_custom_call.1} parent=11 // pred_check
          %p331 = pneg %p96
        $region14: #{tpu_custom_call.1} parent=11 // pred_check_branch
          %333 = sbr.rel (%p331) target = $region16
        $region15: #{tpu_custom_call.1} parent=11 // pred_region
          %s335 = ssub.s32 16, 16
          %336 = vsyncadd [#allocation7], %s335
          %s338 = sshll.u32 [#allocation6], 4
          %s339 = int_to_ptr.vmem [resolvable:$true] %s338
          %341 = dma.hbm_to_vmem [thread:$0]  %s1, 16, %s339, [#allocation7]
        $region16: #{tpu_custom_call.1} parent=11 // pred_fallthru
          _
        // Predicated region
        $region17: #{tpu_custom_call.1} parent=11 // pred_check
          %p342 = pneg %p122
        $region18: #{tpu_custom_call.1} parent=11 // pred_check_branch
          %344 = sbr.rel (%p342) target = $region20
        $region19: #{tpu_custom_call.1} parent=11 // pred_region
          %s346 = ssub.s32 128, 128
          %347 = vsyncadd [#allocation7], %s346
          %s348 = smul.addr %s39, 128
          %s349 = scalar_lea.hbm %s2, %s348
          %s351 = sshll.u32 [#allocation8], 4
          %s352 = int_to_ptr.vmem [resolvable:$true] %s351
          %354 = dma.hbm_to_vmem [thread:$0]  %s349, 128, %s352, [#allocation7]
        $region20: #{tpu_custom_call.1} parent=11 // pred_fallthru
          _
        // Predicated region
        $region21: #{tpu_custom_call.1} parent=11 // pred_check
          %p355 = pneg %p148
        $region22: #{tpu_custom_call.1} parent=11 // pred_check_branch
          %357 = sbr.rel (%p355) target = $region24
        $region23: #{tpu_custom_call.1} parent=11 // pred_region
          %s359 = ssub.s32 128, 128
          %360 = vsyncadd [#allocation10], %s359
          %s361 = smul.addr %s39, 128
          %s362 = scalar_lea.hbm %s3, %s361
          %s364 = sshll.u32 [#allocation9], 4
          %s365 = int_to_ptr.vmem [resolvable:$true] %s364
          %367 = dma.hbm_to_vmem [thread:$0]  %s362, 128, %s365, [#allocation10]
        $region24: #{tpu_custom_call.1} parent=11 // pred_fallthru
          _
        // Predicated region
        $region25: #{tpu_custom_call.1} parent=11 // pred_check
          %p368 = pneg %p174
        $region26: #{tpu_custom_call.1} parent=11 // pred_check_branch
          %370 = sbr.rel (%p368) target = $region28
        $region27: #{tpu_custom_call.1} parent=11 // pred_region
          %s372 = ssub.s32 512, 512
          %373 = vsyncadd [#allocation10], %s372
          %s374 = smul.addr %s40, 128
          %s375 = scalar_lea.hbm %s4, %s374
          %s376 = sshll.u32 [#allocation11], 4
          %s377 = int_to_ptr.vmem [resolvable:$true] %s376
          %382 = dma.hbm_to_vmem [thread:$0]  %s375, 512, %s377, [#allocation10], 128, 128, 8
        $region28: #{tpu_custom_call.1} parent=11 // pred_fallthru
          _
        // Predicated region
        $region29: #{tpu_custom_call.1} parent=11 // pred_check
          %p383 = pneg %p200
        $region30: #{tpu_custom_call.1} parent=11 // pred_check_branch
          %385 = sbr.rel (%p383) target = $region32
        $region31: #{tpu_custom_call.1} parent=11 // pred_region
          %s387 = ssub.s32 512, 512
          %388 = vsyncadd [#allocation13], %s387
          %s389 = smul.addr %s40, 128
          %s390 = scalar_lea.hbm %s5, %s389
          %s391 = sshll.u32 [#allocation12], 4
          %s392 = int_to_ptr.vmem [resolvable:$true] %s391
          %397 = dma.hbm_to_vmem [thread:$0]  %s390, 512, %s392, [#allocation13], 128, 128, 8
        $region32: #{tpu_custom_call.1} parent=11 // pred_fallthru
          _
        // Predicated region
        $region33: #{tpu_custom_call.1} parent=11 // pred_check
          %p398 = pneg %p226
        $region34: #{tpu_custom_call.1} parent=11 // pred_check_branch
          %400 = sbr.rel (%p398) target = $region36
        $region35: #{tpu_custom_call.1} parent=11 // pred_region
          %s402 = ssub.s32 512, 512
          %403 = vsyncadd [#allocation13], %s402
          %s404 = smul.addr %s40, 128
          %s405 = scalar_lea.hbm %s6, %s404
          %s406 = sshll.u32 [#allocation14], 4
          %s407 = int_to_ptr.vmem [resolvable:$true] %s406
          %412 = dma.hbm_to_vmem [thread:$0]  %s405, 512, %s407, [#allocation13], 128, 128, 8
        $region36: #{tpu_custom_call.1} parent=11 // pred_fallthru
          _
      $region12: #{tpu_custom_call.1} parent=5 // pred_fallthru
        _
      %p413 = scmp.lt.s32.totalorder %s28, 2
      // Predicated region
      $region37: #{tpu_custom_call.1} parent=5 // pred_check
        %p414 = pneg %p413
      $region38: #{tpu_custom_call.1} parent=5 // pred_check_branch
        %416 = sbr.rel (%p414) target = $region40
      $region39: #{tpu_custom_call.1} parent=5 // pred_region
        // Predicated region
        $region41: #{tpu_custom_call.1} parent=39 // pred_check
          %p417 = pneg %p69
        $region42: #{tpu_custom_call.1} parent=39 // pred_check_branch
          %419 = sbr.rel (%p417) target = $region44
        $region43: #{tpu_custom_call.1} parent=39 // pred_region
          %s420 = sand.u32 %s59, 1
          %s421 = scalar_lea.sflag [#allocation4], %s420
          %s422 = sand.u32 %s59, 1
          %s423 = smul.addr %s422, 8
          %s424 = scalar_lea.vmem [#allocation3], %s423
          %s426 = ssub.s32 128, 128
          %427 = vsyncadd %s421, %s426
          %s428 = sadd.s32 %s36, %s35
          %s429 = smul.addr %s428, 128
          %s430 = scalar_lea.hbm %s0, %s429
          %s432 = sshll.u32 %s424, 4
          %s433 = int_to_ptr.vmem [resolvable:$true] %s432
          %435 = dma.hbm_to_vmem [thread:$0]  %s430, 128, %s433, %s421
        $region44: #{tpu_custom_call.1} parent=39 // pred_fallthru
          _
      $region40: #{tpu_custom_call.1} parent=5 // pred_fallthru
        _
      %p436 = scmp.le.s32.totalorder 1, %s28
      %p437 = scmp.lt.s32.totalorder %s28, 3
      %p438 = pnand %p436, %p437
      %p439 = pneg %p438
      // Predicated region
      $region45: #{tpu_custom_call.1} parent=5 // pred_check
        _
      $region46: #{tpu_custom_call.1} parent=5 // pred_check_branch
        %441 = sbr.rel (%p438) target = $region48
      $region47: #{tpu_custom_call.1} parent=5 // pred_region
        %s442 = ssub.s32 %s28, 1
        %s443 = sand.u32 %s62, 1
        %s444 = scalar_lea.sflag [#allocation4], %s443
        %s445 = sand.u32 %s62, 1
        %s446 = smul.addr %s445, 8
        %s447 = scalar_lea.vmem [#allocation3], %s446
        // Predicated region
        $region49: #{tpu_custom_call.1} parent=47 // pred_check
          %p448 = pneg %p75
        $region50: #{tpu_custom_call.1} parent=47 // pred_check_branch
          %450 = sbr.rel (%p448) target = $region52
        $region51: #{tpu_custom_call.1} parent=47 // pred_region
          %451 = dma.done %s444, 128
        $region52: #{tpu_custom_call.1} parent=47 // pred_fallthru
          _
        // Predicated region
        $region53: #{tpu_custom_call.1} parent=47 // pred_check
          %p452 = pneg %p96
        $region54: #{tpu_custom_call.1} parent=47 // pred_check_branch
          %454 = sbr.rel (%p452) target = $region56
        $region55: #{tpu_custom_call.1} parent=47 // pred_region
          %455 = dma.done [#allocation7], 16
        $region56: #{tpu_custom_call.1} parent=47 // pred_fallthru
          _
        // Predicated region
        $region57: #{tpu_custom_call.1} parent=47 // pred_check
          %p456 = pneg %p122
        $region58: #{tpu_custom_call.1} parent=47 // pred_check_branch
          %458 = sbr.rel (%p456) target = $region60
        $region59: #{tpu_custom_call.1} parent=47 // pred_region
          %459 = dma.done [#allocation7], 128
        $region60: #{tpu_custom_call.1} parent=47 // pred_fallthru
          _
        // Predicated region
        $region61: #{tpu_custom_call.1} parent=47 // pred_check
          %p460 = pneg %p148
        $region62: #{tpu_custom_call.1} parent=47 // pred_check_branch
          %462 = sbr.rel (%p460) target = $region64
        $region63: #{tpu_custom_call.1} parent=47 // pred_region
          %463 = dma.done [#allocation10], 128
        $region64: #{tpu_custom_call.1} parent=47 // pred_fallthru
          _
        // Predicated region
        $region65: #{tpu_custom_call.1} parent=47 // pred_check
          %p464 = pneg %p174
        $region66: #{tpu_custom_call.1} parent=47 // pred_check_branch
          %466 = sbr.rel (%p464) target = $region68
        $region67: #{tpu_custom_call.1} parent=47 // pred_region
          %467 = dma.done [#allocation10], 512
        $region68: #{tpu_custom_call.1} parent=47 // pred_fallthru
          _
        // Predicated region
        $region69: #{tpu_custom_call.1} parent=47 // pred_check
          %p468 = pneg %p200
        $region70: #{tpu_custom_call.1} parent=47 // pred_check_branch
          %470 = sbr.rel (%p468) target = $region72
        $region71: #{tpu_custom_call.1} parent=47 // pred_region
          %471 = dma.done [#allocation13], 512
        $region72: #{tpu_custom_call.1} parent=47 // pred_fallthru
          _
        // Predicated region
        $region73: #{tpu_custom_call.1} parent=47 // pred_check
          %p472 = pneg %p226
        $region74: #{tpu_custom_call.1} parent=47 // pred_check_branch
          %474 = sbr.rel (%p472) target = $region76
        $region75: #{tpu_custom_call.1} parent=47 // pred_region
          %475 = dma.done [#allocation13], 512
        $region76: #{tpu_custom_call.1} parent=47 // pred_fallthru
          _
        %s476 = sand.u32 %s62, 1
        %s477 = scalar_lea.sflag [#allocation4], %s476
        %s478 = sand.u32 %s62, 1
        %s479 = smul.addr %s478, 8
        %s480 = scalar_lea.vmem [#allocation3], %s479
        %p481 = pneg %p75
        %p482 = pneg %p72
        %p483 = pneg %p96
        %p484 = pneg %p93
        %p485 = pneg %p122
        %p486 = pneg %p119
        %p487 = pneg %p148
        %p488 = pneg %p145
        %p489 = pneg %p174
        %p490 = pneg %p171
        %p491 = pneg %p200
        %p492 = pneg %p197
        %p493 = pneg %p226
        %p494 = pneg %p223
        %p495 = pneg %p256
        %p496 = pneg %p253
        %s497 = sand.u32 %s243, 1
        %s498 = scalar_lea.sflag [#allocation5], %s497
        %s499 = sand.u32 %s243, 1
        %s500 = smul.addr %s499, 32
        %s501 = scalar_lea.vmem [#allocation15], %s500
        %p502 = pneg %p286
        %p503 = pneg %p283
        %s504 = sand.u32 %s33, 1
        %s505 = scalar_lea.sflag [#allocation17], %s504
        %s506 = sand.u32 %s273, 1
        %s507 = smul.addr %s506, 32
        %s508 = scalar_lea.vmem [#allocation16], %s507
        %p509 = pneg %p316
        %p510 = pneg %p313
        %s511 = sand.u32 %s33, 1
        %s512 = scalar_lea.sflag [#allocation17], %s511
        %s513 = sand.u32 %s303, 1
        %s514 = smul.addr %s513, 32
        %s515 = scalar_lea.vmem [#allocation18], %s514
        %s516 = smul.u32 4, %s40
        %s517 = smul.u32 4, %s40
        %s518 = smul.u32 4, %s40
        %p519 = scmp.eq.s32.totalorder %s40, 0
        // Predicated region
        $region77: #{tpu_custom_call.1} parent=47 // pred_check
          %p520 = pneg %p519
        $region78: #{tpu_custom_call.1} parent=47 // pred_check_branch
          %522 = sbr.rel (%p520) target = $region80
        $region79: #{tpu_custom_call.1} parent=47 // pred_region
          %v523 = vld [vmem:[%s447] sm:$0xff]
          %v524 = vmul.f32 %v523, %v523
          %vm525 = vcmask 261120
          %v526 = vsel %vm525, %v524, 0.0
          %527 = vadd.xlane.f32.xlu0 %v526
          %v528 = vpop.xlane.xlu0 %527
          %v529 = vrcp.pop 32.0
          %v530 = vmul.f32 %v528, %v529
          %v531 = vadd.f32 %v530, 1e-05
          %v532 = vrsqrt.pop %v531
          %v533 = vmul.f32 %v523, %v532
          %v534 = vld [vmem:[#allocation6] sm:$0x1]
          %v536 = vlaneseq
          %v537 = vshrl.u32 %v536, 7
          %v538 = vsub.s32 0, %v537
          %v539 = vrot.slane %v534, %v538
          %v541 = vmul.f32 %v533, %v539
          %542 = vst.msk [vmem:[#allocation2] sm:$0xff] %vm525, %v541
        $region80: #{tpu_custom_call.1} parent=47 // pred_fallthru
          _
        %v543 = vld [vmem:[#allocation2] sm:$0xff]
        %v544 = vld [vmem:[#allocation8] sm:$0xff]
        %v545 = vld [vmem:[#allocation9] sm:$0xff]
        %v546 = vld [vmem:[#allocation11] sm:$0xff]
        %v547 = vld [vmem:[#allocation11 + $0x8] sm:$0xff]
        %v548 = vld [vmem:[#allocation11 + $0x10] sm:$0xff]
        %v549 = vld [vmem:[#allocation11 + $0x18] sm:$0xff]
        %vm550 = vcmask 261120
        %v552 = vsel %vm550, %v543, 0
        %554 = vmatprep.subr.mxu0 0.0
        %555 = vmatpush1.msra.mxu0 %v546
        %556 = vmatprep.subr.mxu0 0.0
        %557 = vmatpush1.msra.mxu0 %v547
        %558 = vmatprep.subr.mxu0 0.0
        %559 = vmatpush1.msra.mxu0 %v548
        %560 = vmatprep.subr.mxu0 0.0
        %561 = vmatpush1.msra.mxu0 %v549
        %562 = vmatprep.subr.mxu0 0.0
        %563 = vmatpush1.msra.mxu0 0.0
        %564 = vmatprep.subr.mxu0 0.0
        %565 = vmatpush1.msra.mxu0 0.0
        %566 = vmatprep.subr.mxu0 0.0
        %567 = vmatpush1.msra.mxu0 0.0
        %568 = vmatprep.subr.mxu0 0.0
        %569 = vmatpush1.msra.mxu0 0.0
        %570 = vmatprep.subr.mxu0 0.0
        %571 = vmatpush1.msra.mxu0 0.0
        %572 = vmatprep.subr.mxu0 0.0
        %573 = vmatpush1.msra.mxu0 0.0
        %574 = vmatprep.subr.mxu0 0.0
        %575 = vmatpush1.msra.mxu0 0.0
        %576 = vmatprep.subr.mxu0 0.0
        %577 = vmatpush1.msra.mxu0 0.0
        %578 = vmatprep.subr.mxu0 0.0
        %579 = vmatpush1.msra.mxu0 0.0
        %580 = vmatprep.subr.mxu0 0.0
        %581 = vmatpush1.msra.mxu0 0.0
        %582 = vmatprep.subr.mxu0 0.0
        %583 = vmatpush1.msra.mxu0 0.0
        %584 = vmatprep.subr.mxu0 0.0
        %585 = vmatpush1.msra.mxu0 0.0
        %586 = vmatprep.subr.mxu0 0.0
        %587 = vmatpush1.msra.mxu0 0.0
        %588 = vmatprep.subr.mxu0 0.0
        %589 = vmatpush1.msra.mxu0 0.0
        %590 = vmatprep.subr.mxu0 0.0
        %591 = vmatpush1.msra.mxu0 0.0
        %592 = vmatprep.subr.mxu0 0.0
        %593 = vmatpush1.msra.mxu0 0.0
        %594 = vmatprep.subr.mxu0 0.0
        %595 = vmatpush1.msra.mxu0 0.0
        %596 = vmatprep.subr.mxu0 0.0
        %597 = vmatpush1.msra.mxu0 0.0
        %598 = vmatprep.subr.mxu0 0.0
        %599 = vmatpush1.msra.mxu0 0.0
        %600 = vmatprep.subr.mxu0 0.0
        %601 = vmatpush1.msra.mxu0 0.0
        %602 = vmatprep.subr.mxu0 0.0
        %603 = vmatpush1.msra.mxu0 0.0
        %604 = vmatprep.subr.mxu0 0.0
        %605 = vmatpush1.msra.mxu0 0.0
        %606 = vmatprep.subr.mxu0 0.0
        %607 = vmatpush1.msra.mxu0 0.0
        %608 = vmatprep.subr.mxu0 0.0
        %609 = vmatpush1.msra.mxu0 0.0
        %610 = vmatprep.subr.mxu0 0.0
        %611 = vmatpush1.msra.mxu0 0.0
        %612 = vmatprep.subr.mxu0 0.0
        %613 = vmatpush1.msra.mxu0 0.0
        %614 = vmatprep.subr.mxu0 0.0
        %615 = vmatpush1.msra.mxu0 0.0
        %616 = vmatprep.subr.mxu0 0.0
        %617 = vmatpush1.msra.mxu0 0.0
        %618 = vmatprep.mubr.f32.mxu0 0.0
        %619 = vmatmul.mubr.f32.gmra.mrb[0].mxu0 %v552
        %v620 = vpop.f32.mrb[0].mxu0
        %v621 = vadd.f32 0.0, %v620
        %v622 = vpop.f32.mrb[0].mxu0
        %623 = vdwg.mxu0
        %v624 = vld [vmem:[#allocation12] sm:$0xff]
        %v625 = vld [vmem:[#allocation12 + $0x8] sm:$0xff]
        %v626 = vld [vmem:[#allocation12 + $0x10] sm:$0xff]
        %v627 = vld [vmem:[#allocation12 + $0x18] sm:$0xff]
        %628 = vmatprep.subr.mxu0 0.0
        %629 = vmatpush1.msra.mxu0 %v624
        %630 = vmatprep.subr.mxu0 0.0
        %631 = vmatpush1.msra.mxu0 %v625
        %632 = vmatprep.subr.mxu0 0.0
        %633 = vmatpush1.msra.mxu0 %v626
        %634 = vmatprep.subr.mxu0 0.0
        %635 = vmatpush1.msra.mxu0 %v627
        %636 = vmatprep.subr.mxu0 0.0
        %637 = vmatpush1.msra.mxu0 0.0
        %638 = vmatprep.subr.mxu0 0.0
        %639 = vmatpush1.msra.mxu0 0.0
        %640 = vmatprep.subr.mxu0 0.0
        %641 = vmatpush1.msra.mxu0 0.0
        %642 = vmatprep.subr.mxu0 0.0
        %643 = vmatpush1.msra.mxu0 0.0
        %644 = vmatprep.subr.mxu0 0.0
        %645 = vmatpush1.msra.mxu0 0.0
        %646 = vmatprep.subr.mxu0 0.0
        %647 = vmatpush1.msra.mxu0 0.0
        %648 = vmatprep.subr.mxu0 0.0
        %649 = vmatpush1.msra.mxu0 0.0
        %650 = vmatprep.subr.mxu0 0.0
        %651 = vmatpush1.msra.mxu0 0.0
        %652 = vmatprep.subr.mxu0 0.0
        %653 = vmatpush1.msra.mxu0 0.0
        %654 = vmatprep.subr.mxu0 0.0
        %655 = vmatpush1.msra.mxu0 0.0
        %656 = vmatprep.subr.mxu0 0.0
        %657 = vmatpush1.msra.mxu0 0.0
        %658 = vmatprep.subr.mxu0 0.0
        %659 = vmatpush1.msra.mxu0 0.0
        %660 = vmatprep.subr.mxu0 0.0
        %661 = vmatpush1.msra.mxu0 0.0
        %662 = vmatprep.subr.mxu0 0.0
        %663 = vmatpush1.msra.mxu0 0.0
        %664 = vmatprep.subr.mxu0 0.0
        %665 = vmatpush1.msra.mxu0 0.0
        %666 = vmatprep.subr.mxu0 0.0
        %667 = vmatpush1.msra.mxu0 0.0
        %668 = vmatprep.subr.mxu0 0.0
        %669 = vmatpush1.msra.mxu0 0.0
        %670 = vmatprep.subr.mxu0 0.0
        %671 = vmatpush1.msra.mxu0 0.0
        %672 = vmatprep.subr.mxu0 0.0
        %673 = vmatpush1.msra.mxu0 0.0
        %674 = vmatprep.subr.mxu0 0.0
        %675 = vmatpush1.msra.mxu0 0.0
        %676 = vmatprep.subr.mxu0 0.0
        %677 = vmatpush1.msra.mxu0 0.0
        %678 = vmatprep.subr.mxu0 0.0
        %679 = vmatpush1.msra.mxu0 0.0
        %680 = vmatprep.subr.mxu0 0.0
        %681 = vmatpush1.msra.mxu0 0.0
        %682 = vmatprep.subr.mxu0 0.0
        %683 = vmatpush1.msra.mxu0 0.0
        %684 = vmatprep.subr.mxu0 0.0
        %685 = vmatpush1.msra.mxu0 0.0
        %686 = vmatprep.subr.mxu0 0.0
        %687 = vmatpush1.msra.mxu0 0.0
        %688 = vmatprep.subr.mxu0 0.0
        %689 = vmatpush1.msra.mxu0 0.0
        %690 = vmatprep.subr.mxu0 0.0
        %691 = vmatpush1.msra.mxu0 0.0
        %692 = vmatprep.mubr.f32.mxu0 0.0
        %693 = vmatmul.mubr.f32.gmra.mrb[0].mxu0 %v552
        %v694 = vpop.f32.mrb[0].mxu0
        %v695 = vadd.f32 0.0, %v694
        %v696 = vpop.f32.mrb[0].mxu0
        %697 = vdwg.mxu0
        %v698 = vld [vmem:[#allocation14] sm:$0xff]
        %v699 = vld [vmem:[#allocation14 + $0x8] sm:$0xff]
        %v700 = vld [vmem:[#allocation14 + $0x10] sm:$0xff]
        %v701 = vld [vmem:[#allocation14 + $0x18] sm:$0xff]
        %702 = vmatprep.subr.mxu0 0.0
        %703 = vmatpush1.msra.mxu0 %v698
        %704 = vmatprep.subr.mxu0 0.0
        %705 = vmatpush1.msra.mxu0 %v699
        %706 = vmatprep.subr.mxu0 0.0
        %707 = vmatpush1.msra.mxu0 %v700
        %708 = vmatprep.subr.mxu0 0.0
        %709 = vmatpush1.msra.mxu0 %v701
        %710 = vmatprep.subr.mxu0 0.0
        %711 = vmatpush1.msra.mxu0 0.0
        %712 = vmatprep.subr.mxu0 0.0
        %713 = vmatpush1.msra.mxu0 0.0
        %714 = vmatprep.subr.mxu0 0.0
        %715 = vmatpush1.msra.mxu0 0.0
        %716 = vmatprep.subr.mxu0 0.0
        %717 = vmatpush1.msra.mxu0 0.0
        %718 = vmatprep.subr.mxu0 0.0
        %719 = vmatpush1.msra.mxu0 0.0
        %720 = vmatprep.subr.mxu0 0.0
        %721 = vmatpush1.msra.mxu0 0.0
        %722 = vmatprep.subr.mxu0 0.0
        %723 = vmatpush1.msra.mxu0 0.0
        %724 = vmatprep.subr.mxu0 0.0
        %725 = vmatpush1.msra.mxu0 0.0
        %726 = vmatprep.subr.mxu0 0.0
        %727 = vmatpush1.msra.mxu0 0.0
        %728 = vmatprep.subr.mxu0 0.0
        %729 = vmatpush1.msra.mxu0 0.0
        %730 = vmatprep.subr.mxu0 0.0
        %731 = vmatpush1.msra.mxu0 0.0
        %732 = vmatprep.subr.mxu0 0.0
        %733 = vmatpush1.msra.mxu0 0.0
        %734 = vmatprep.subr.mxu0 0.0
        %735 = vmatpush1.msra.mxu0 0.0
        %736 = vmatprep.subr.mxu0 0.0
        %737 = vmatpush1.msra.mxu0 0.0
        %738 = vmatprep.subr.mxu0 0.0
        %739 = vmatpush1.msra.mxu0 0.0
        %740 = vmatprep.subr.mxu0 0.0
        %741 = vmatpush1.msra.mxu0 0.0
        %742 = vmatprep.subr.mxu0 0.0
        %743 = vmatpush1.msra.mxu0 0.0
        %744 = vmatprep.subr.mxu0 0.0
        %745 = vmatpush1.msra.mxu0 0.0
        %746 = vmatprep.subr.mxu0 0.0
        %747 = vmatpush1.msra.mxu0 0.0
        %748 = vmatprep.subr.mxu0 0.0
        %749 = vmatpush1.msra.mxu0 0.0
        %750 = vmatprep.subr.mxu0 0.0
        %751 = vmatpush1.msra.mxu0 0.0
        %752 = vmatprep.subr.mxu0 0.0
        %753 = vmatpush1.msra.mxu0 0.0
        %754 = vmatprep.subr.mxu0 0.0
        %755 = vmatpush1.msra.mxu0 0.0
        %756 = vmatprep.subr.mxu0 0.0
        %757 = vmatpush1.msra.mxu0 0.0
        %758 = vmatprep.subr.mxu0 0.0
        %759 = vmatpush1.msra.mxu0 0.0
        %760 = vmatprep.subr.mxu0 0.0
        %761 = vmatpush1.msra.mxu0 0.0
        %762 = vmatprep.subr.mxu0 0.0
        %763 = vmatpush1.msra.mxu0 0.0
        %764 = vmatprep.subr.mxu0 0.0
        %765 = vmatpush1.msra.mxu0 0.0
        %766 = vmatprep.mubr.f32.mxu0 0.0
        %767 = vmatmul.mubr.f32.gmra.mrb[0].mxu0 %v552
        %v768 = vpop.f32.mrb[0].mxu0
        %v769 = vadd.f32 0.0, %v768
        %v770 = vpop.f32.mrb[0].mxu0
        %771 = vdwg.mxu0
        %v772 = vsub.f32 0.0, %v621
        %774 = vrot.lane.b32.xlu0 %v772, 126
        %v775 = vpop.permute.xlu0 %774
        %778 = vrot.lane.b32.xlu0 %v621, 2
        %v779 = vpop.permute.xlu0 %778
        %vm781 = vcmask 15360
        %v782 = vsel %vm781, %v775, %v779
        %v783 = vmul.f32 %v621, %v544
        %v784 = vmul.f32 %v782, %v545
        %v785 = vadd.f32 %v783, %v784
        %vm786 = vcmask 31744
        %v787 = vsel %vm786, %v785, %v621
        %v788 = vmul.f32 %v787, 0.35355338
        %vm789 = vcmask 64512
        %790 = vst.msk [vmem:[%s501] sm:$0xff] %vm789, %v788
        %v791 = vsub.f32 0.0, %v695
        %793 = vrot.lane.b32.xlu0 %v791, 126
        %v794 = vpop.permute.xlu0 %793
        %797 = vrot.lane.b32.xlu0 %v695, 2
        %v798 = vpop.permute.xlu0 %797
        %v800 = vsel %vm781, %v794, %v798
        %v801 = vmul.f32 %v695, %v544
        %v802 = vmul.f32 %v800, %v545
        %v803 = vadd.f32 %v801, %v802
        %v804 = vsel %vm786, %v803, %v695
        %805 = vst.msk [vmem:[%s508] sm:$0xff] %vm789, %v804
        %806 = vst.msk [vmem:[%s515] sm:$0xff] %vm789, %v769
        %807 = vrot.lane.b32.xlu0 %v772, 118
        %v808 = vpop.permute.xlu0 %807
        %810 = vrot.lane.b32.xlu0 %v621, 122
        %v811 = vpop.permute.xlu0 %810
        %v813 = vsel %vm781, %v808, %v811
        %815 = vrot.lane.b32.xlu0 %v544, 8
        %v816 = vpop.permute.xlu0 %815
        %v818 = vmul.f32 %v621, %v816
        %v819 = vmul.f32 %v813, %v545
        %821 = vrot.lane.b32.xlu0 %v819, 8
        %v822 = vpop.permute.xlu0 %821
        %v824 = vadd.f32 %v818, %v822
        %826 = vrot.lane.b32.xlu0 %v824, 120
        %v827 = vpop.permute.xlu0 %826
        %829 = vrot.lane.b32.xlu0 %v621, 120
        %v830 = vpop.permute.xlu0 %829
        %v832 = vsel %vm786, %v827, %v830
        %v833 = vmul.f32 %v832, 0.35355338
        %s834 = scalar_lea.vmem %s501, 8 [#allocation15]
        %835 = vst.msk [vmem:[%s834] sm:$0xff] %vm789, %v833
        %836 = vrot.lane.b32.xlu0 %v791, 118
        %v837 = vpop.permute.xlu0 %836
        %839 = vrot.lane.b32.xlu0 %v695, 122
        %v840 = vpop.permute.xlu0 %839
        %v842 = vsel %vm781, %v837, %v840
        %v843 = vmul.f32 %v695, %v816
        %v844 = vmul.f32 %v842, %v545
        %846 = vrot.lane.b32.xlu0 %v844, 8
        %v847 = vpop.permute.xlu0 %846
        %v849 = vadd.f32 %v843, %v847
        %851 = vrot.lane.b32.xlu0 %v849, 120
        %v852 = vpop.permute.xlu0 %851
        %854 = vrot.lane.b32.xlu0 %v695, 120
        %v855 = vpop.permute.xlu0 %854
        %v857 = vsel %vm786, %v852, %v855
        %s858 = scalar_lea.vmem %s508, 8 [#allocation16]
        %859 = vst.msk [vmem:[%s858] sm:$0xff] %vm789, %v857
        %861 = vrot.lane.b32.xlu0 %v769, 120
        %v862 = vpop.permute.xlu0 %861
        %s864 = scalar_lea.vmem %s515, 8 [#allocation18]
        %865 = vst.msk [vmem:[%s864] sm:$0xff] %vm789, %v862
        %866 = vrot.lane.b32.xlu0 %v772, 110
        %v867 = vpop.permute.xlu0 %866
        %869 = vrot.lane.b32.xlu0 %v621, 114
        %v870 = vpop.permute.xlu0 %869
        %v872 = vsel %vm781, %v867, %v870
        %873 = vrot.lane.b32.xlu0 %v544, 16
        %v874 = vpop.permute.xlu0 %873
        %v876 = vmul.f32 %v621, %v874
        %v877 = vmul.f32 %v872, %v545
        %879 = vrot.lane.b32.xlu0 %v877, 16
        %v880 = vpop.permute.xlu0 %879
        %v882 = vadd.f32 %v876, %v880
        %884 = vrot.lane.b32.xlu0 %v882, 112
        %v885 = vpop.permute.xlu0 %884
        %887 = vrot.lane.b32.xlu0 %v621, 112
        %v888 = vpop.permute.xlu0 %887
        %v890 = vsel %vm786, %v885, %v888
        %v891 = vmul.f32 %v890, 0.35355338
        %s892 = scalar_lea.vmem %s501, 16 [#allocation15]
        %893 = vst.msk [vmem:[%s892] sm:$0xff] %vm789, %v891
        %894 = vrot.lane.b32.xlu0 %v791, 110
        %v895 = vpop.permute.xlu0 %894
        %897 = vrot.lane.b32.xlu0 %v695, 114
        %v898 = vpop.permute.xlu0 %897
        %v900 = vsel %vm781, %v895, %v898
        %v901 = vmul.f32 %v695, %v874
        %v902 = vmul.f32 %v900, %v545
        %904 = vrot.lane.b32.xlu0 %v902, 16
        %v905 = vpop.permute.xlu0 %904
        %v907 = vadd.f32 %v901, %v905
        %909 = vrot.lane.b32.xlu0 %v907, 112
        %v910 = vpop.permute.xlu0 %909
        %912 = vrot.lane.b32.xlu0 %v695, 112
        %v913 = vpop.permute.xlu0 %912
        %v915 = vsel %vm786, %v910, %v913
        %s916 = scalar_lea.vmem %s508, 16 [#allocation16]
        %917 = vst.msk [vmem:[%s916] sm:$0xff] %vm789, %v915
        %918 = vrot.lane.b32.xlu0 %v769, 112
        %v919 = vpop.permute.xlu0 %918
        %s921 = scalar_lea.vmem %s515, 16 [#allocation18]
        %922 = vst.msk [vmem:[%s921] sm:$0xff] %vm789, %v919
        %923 = vrot.lane.b32.xlu0 %v772, 102
        %v924 = vpop.permute.xlu0 %923
        %926 = vrot.lane.b32.xlu0 %v621, 106
        %v927 = vpop.permute.xlu0 %926
        %v929 = vsel %vm781, %v924, %v927
        %930 = vrot.lane.b32.xlu0 %v544, 24
        %v931 = vpop.permute.xlu0 %930
        %v933 = vmul.f32 %v621, %v931
        %v934 = vmul.f32 %v929, %v545
        %936 = vrot.lane.b32.xlu0 %v934, 24
        %v937 = vpop.permute.xlu0 %936
        %v939 = vadd.f32 %v933, %v937
        %941 = vrot.lane.b32.xlu0 %v939, 104
        %v942 = vpop.permute.xlu0 %941
        %944 = vrot.lane.b32.xlu0 %v621, 104
        %v945 = vpop.permute.xlu0 %944
        %v947 = vsel %vm786, %v942, %v945
        %v948 = vmul.f32 %v947, 0.35355338
        %s949 = scalar_lea.vmem %s501, 24 [#allocation15]
        %950 = vst.msk [vmem:[%s949] sm:$0xff] %vm789, %v948
        %951 = vrot.lane.b32.xlu0 %v791, 102
        %v952 = vpop.permute.xlu0 %951
        %954 = vrot.lane.b32.xlu0 %v695, 106
        %v955 = vpop.permute.xlu0 %954
        %v957 = vsel %vm781, %v952, %v955
        %v958 = vmul.f32 %v695, %v931
        %v959 = vmul.f32 %v957, %v545
        %961 = vrot.lane.b32.xlu0 %v959, 24
        %v962 = vpop.permute.xlu0 %961
        %v964 = vadd.f32 %v958, %v962
        %966 = vrot.lane.b32.xlu0 %v964, 104
        %v967 = vpop.permute.xlu0 %966
        %969 = vrot.lane.b32.xlu0 %v695, 104
        %v970 = vpop.permute.xlu0 %969
        %v972 = vsel %vm786, %v967, %v970
        %s973 = scalar_lea.vmem %s508, 24 [#allocation16]
        %974 = vst.msk [vmem:[%s973] sm:$0xff] %vm789, %v972
        %975 = vrot.lane.b32.xlu0 %v769, 104
        %v976 = vpop.permute.xlu0 %975
        %s978 = scalar_lea.vmem %s515, 24 [#allocation18]
        %979 = vst.msk [vmem:[%s978] sm:$0xff] %vm789, %v976
        %s980 = sand.u32 %s243, 1
        %s981 = scalar_lea.sflag [#allocation5], %s980
        %s982 = sand.u32 %s243, 1
        %s983 = smul.addr %s982, 32
        %s984 = scalar_lea.vmem [#allocation15], %s983
        %s985 = sand.u32 %s33, 1
        %s986 = scalar_lea.sflag [#allocation17], %s985
        %s987 = sand.u32 %s273, 1
        %s988 = smul.addr %s987, 32
        %s989 = scalar_lea.vmem [#allocation16], %s988
        %s990 = sand.u32 %s33, 1
        %s991 = scalar_lea.sflag [#allocation17], %s990
        %s992 = sand.u32 %s303, 1
        %s993 = smul.addr %s992, 32
        %s994 = scalar_lea.vmem [#allocation18], %s993
        // Predicated region
        $region81: #{tpu_custom_call.1} parent=47 // pred_check
          %p995 = pneg %p253
        $region82: #{tpu_custom_call.1} parent=47 // pred_check_branch
          %997 = sbr.rel (%p995) target = $region84
        $region83: #{tpu_custom_call.1} parent=47 // pred_region
          %s998 = smul.u32 4, %s40
          %s1000 = ssub.s32 512, 512
          %1001 = vsyncadd %s981, %s1000
          %s1002 = sadd.s32 %s39, %s998
          %s1003 = smul.addr %s38, 4
          %s1004 = sadd.s32 %s1002, %s1003
          %s1005 = smul.addr %s1004, 128
          %s1006 = scalar_lea.hbm %s7, %s1005
          %s1007 = sshll.u32 %s984, 4
          %s1008 = int_to_ptr.vmem [resolvable:$true] %s1007
          %1013 = dma.vmem_to_hbm [thread:$0]  %s1008, 512, %s1006, %s981, 128, 128, 8
        $region84: #{tpu_custom_call.1} parent=47 // pred_fallthru
          _
        // Predicated region
        $region85: #{tpu_custom_call.1} parent=47 // pred_check
          %p1014 = pneg %p283
        $region86: #{tpu_custom_call.1} parent=47 // pred_check_branch
          %1016 = sbr.rel (%p1014) target = $region88
        $region87: #{tpu_custom_call.1} parent=47 // pred_region
          %s1017 = smul.u32 4, %s40
          %s1019 = ssub.s32 512, 512
          %1020 = vsyncadd %s986, %s1019
          %s1021 = sadd.s32 %s39, %s1017
          %s1022 = smul.addr %s38, 4
          %s1023 = sadd.s32 %s1021, %s1022
          %s1024 = smul.addr %s1023, 128
          %s1025 = scalar_lea.hbm %s8, %s1024
          %s1026 = sshll.u32 %s989, 4
          %s1027 = int_to_ptr.vmem [resolvable:$true] %s1026
          %1032 = dma.vmem_to_hbm [thread:$0]  %s1027, 512, %s1025, %s986, 128, 128, 8
        $region88: #{tpu_custom_call.1} parent=47 // pred_fallthru
          _
        // Predicated region
        $region89: #{tpu_custom_call.1} parent=47 // pred_check
          %p1033 = pneg %p313
        $region90: #{tpu_custom_call.1} parent=47 // pred_check_branch
          %1035 = sbr.rel (%p1033) target = $region92
        $region91: #{tpu_custom_call.1} parent=47 // pred_region
          %s1036 = smul.u32 4, %s40
          %s1038 = ssub.s32 512, 512
          %1039 = vsyncadd %s991, %s1038
          %s1040 = sadd.s32 %s39, %s1036
          %s1041 = smul.addr %s38, 4
          %s1042 = sadd.s32 %s1040, %s1041
          %s1043 = smul.addr %s1042, 128
          %s1044 = scalar_lea.hbm %s9, %s1043
          %s1045 = sshll.u32 %s994, 4
          %s1046 = int_to_ptr.vmem [resolvable:$true] %s1045
          %1051 = dma.vmem_to_hbm [thread:$0]  %s1046, 512, %s1044, %s991, 128, 128, 8
        $region92: #{tpu_custom_call.1} parent=47 // pred_fallthru
          _
      $region48: #{tpu_custom_call.1} parent=5 // pred_fallthru
        _
      %p1052 = scmp.le.s32.totalorder 2, %s28
      // Predicated region
      $region93: #{tpu_custom_call.1} parent=5 // pred_check
        %p1053 = pneg %p1052
      $region94: #{tpu_custom_call.1} parent=5 // pred_check_branch
        %1055 = sbr.rel (%p1053) target = $region96
      $region95: #{tpu_custom_call.1} parent=5 // pred_region
        %s1056 = ssub.s32 %s28, 2
        // Predicated region
        $region97: #{tpu_custom_call.1} parent=95 // pred_check
          %p1057 = pneg %p259
        $region98: #{tpu_custom_call.1} parent=95 // pred_check_branch
          %1059 = sbr.rel (%p1057) target = $region100
        $region99: #{tpu_custom_call.1} parent=95 // pred_region
          %s1060 = sand.u32 %s244, 1
          %s1061 = scalar_lea.sflag [#allocation5], %s1060
          %s1062 = sand.u32 %s244, 1
          %s1063 = smul.addr %s1062, 32
          %s1064 = scalar_lea.vmem [#allocation15], %s1063
          %1065 = dma.done %s1061, 512
        $region100: #{tpu_custom_call.1} parent=95 // pred_fallthru
          _
        // Predicated region
        $region101: #{tpu_custom_call.1} parent=95 // pred_check
          %p1066 = pneg %p289
        $region102: #{tpu_custom_call.1} parent=95 // pred_check_branch
          %1068 = sbr.rel (%p1066) target = $region104
        $region103: #{tpu_custom_call.1} parent=95 // pred_region
          %s1069 = sand.u32 %s34, 1
          %s1070 = scalar_lea.sflag [#allocation17], %s1069
          %s1071 = sand.u32 %s274, 1
          %s1072 = smul.addr %s1071, 32
          %s1073 = scalar_lea.vmem [#allocation16], %s1072
          %1074 = dma.done %s1070, 512
        $region104: #{tpu_custom_call.1} parent=95 // pred_fallthru
          _
        // Predicated region
        $region105: #{tpu_custom_call.1} parent=95 // pred_check
          %p1075 = pneg %p319
        $region106: #{tpu_custom_call.1} parent=95 // pred_check_branch
          %1077 = sbr.rel (%p1075) target = $region108
        $region107: #{tpu_custom_call.1} parent=95 // pred_region
          %s1078 = sand.u32 %s34, 1
          %s1079 = scalar_lea.sflag [#allocation17], %s1078
          %s1080 = sand.u32 %s304, 1
          %s1081 = smul.addr %s1080, 32
          %s1082 = scalar_lea.vmem [#allocation18], %s1081
          %1083 = dma.done %s1079, 512
        $region108: #{tpu_custom_call.1} parent=95 // pred_fallthru
          _
      $region96: #{tpu_custom_call.1} parent=5 // pred_fallthru
        _
    $region6: #{tpu_custom_call.1} parent=1 // loop_footer
      %s32 = sadd.s32 1, %s28
    $region7: #{tpu_custom_call.1} parent=1 // loop_footer_branch
      %27 = sbr.rel target = $region3
    $region8: #{tpu_custom_call.1} parent=1 // loop_exit
      _
    %1084 = vsyncpa [#allocation4], 1
    %s1085 = scalar_lea.sflag [#allocation4], 1
    %1086 = vsyncpa %s1085, 1
    %1087 = vsyncpa [#allocation7], 1
    %1088 = vsyncpa [#allocation10], 1
    %1089 = vsyncpa [#allocation13], 1
    %1090 = vsyncpa [#allocation5], 1
    %s1091 = scalar_lea.sflag [#allocation5], 1
    %1092 = vsyncpa %s1091, 1
    %1093 = vsyncpa [#allocation17], 1
    %s1094 = scalar_lea.sflag [#allocation17], 1
    %1095 = vsyncpa %s1094, 1

</llo_original>
